<compile_context>
chip_gen: v5e
topology: v5e:2x2
jax: 0.10.0
libtpu: 0.0.40
codegen_flags: <defaults>
</compile_context>

<pallas_src>
import functools

import jax
import jax.numpy as jnp
import numpy as np
from jax.experimental import pallas as pl
from jax.experimental.pallas import tpu as pltpu


def _round_up(x, m):
    return (x + m - 1) // m * m


def _make_kernel(num_layers: int, seq_len: int, batch_pad: int, hidden_dim: int,
                 vocab_size: int, gate_pad: int):
    L, T, Bp, H, V, GP = num_layers, seq_len, batch_pad, hidden_dim, vocab_size, gate_pad

    def kernel(tok_ref, h0_ref, *rest):
        # rest layout:
        #   4 refs per layer: w_x  (fused r|z|n input-proj weight; layer 0 folds the embedding),
        #                     w_h  (fused r|z|n recurrent weight),
        #                     b_x  (b_ih+b_hh for r/z lanes, b_ih for n lanes, 0 pad),
        #                     b_hn (b_hh_n in the n lanes, 0 elsewhere)
        #   then: w_out, b_out                    (remaining inputs)
        #   then: logp_ref, h_out_ref             (outputs)
        #   then: g0_buf, seq_buf                 (VMEM scratch)
        w_x = [rest[4 * l + 0] for l in range(L)]
        w_h = [rest[4 * l + 1] for l in range(L)]
        b_x = [rest[4 * l + 2] for l in range(L)]
        b_hn = [rest[4 * l + 3] for l in range(L)]
        w_out_ref = rest[4 * L + 0]
        b_out_ref = rest[4 * L + 1]
        logp_ref = rest[4 * L + 2]
        h_out_ref = rest[4 * L + 3]
        g0_buf = rest[4 * L + 4]
        seq_buf = rest[4 * L + 5]

        # ---- Prologue: fused embedding gather + layer-0 input projection for ALL time steps ----
        tok = tok_ref[...]                                              # (T*Bp, 1) int32
        col = jax.lax.broadcasted_iota(jnp.int32, (T * Bp, V), 1)
        onehot = (col == tok).astype(jnp.float32)                       # (T*Bp, V)
        g0_buf[...] = (
            jnp.dot(onehot, w_x[0][...], preferred_element_type=jnp.float32) + b_x[0][...]
        )

        # Hoist weight loads / bias broadcasts out of the recurrent loop (not CSE'd otherwise).
        w_h_v = [w_h[l][...] for l in range(L)]
        b_hn_v = [jnp.broadcast_to(b_hn[l][...], (Bp, GP)) for l in range(L)]
        w_x_v = [None] + [w_x[l][...] for l in range(1, L)]
        b_x_v = [None] + [jnp.broadcast_to(b_x[l][...], (Bp, GP)) for l in range(1, L)]

        h = [h0_ref[l] for l in range(L)]                               # (Bp, H) each

        # ---- Wavefront recurrence: wavefront step s handles layer l at time t = s - l. ----
        # Layers are visited high -> low so layer l reads h[l-1] as produced at step s-1.
        for s in range(T + L - 1):
            for l in range(L - 1, -1, -1):
                t = s - l
                if not (0 <= t < T):
                    continue
                if l == 0:
                    gi = g0_buf[pl.ds(t * Bp, Bp), :]                   # precomputed, off chain
                else:
                    gi = jnp.dot(h[l - 1], w_x_v[l],
                                 preferred_element_type=jnp.float32) + b_x_v[l]
                gh = jnp.dot(h[l], w_h_v[l],
                             preferred_element_type=jnp.float32) + b_hn_v[l]
                rz = jax.nn.sigmoid(gi + gh)                            # one EUP pass for r and z
                r = rz[:, 0:H]
                z = rz[:, H:2 * H]
                n = jnp.tanh(gi[:, 2 * H:3 * H] + r * gh[:, 2 * H:3 * H])
                h_new = n + z * (h[l] - n)
                h[l] = h_new
                if l == L - 1:
                    seq_buf[pl.ds(t * Bp, Bp), :] = h_new               # top-layer sequence

        for l in range(L):
            h_out_ref[l] = h[l]

        # ---- Output head: one batched matmul + one log-softmax, lane-dense (Vp) store ----
        logits = (
            jnp.dot(seq_buf[...], w_out_ref[...], preferred_element_type=jnp.float32)
            + b_out_ref[...]
        )
        m = jnp.max(logits, axis=-1, keepdims=True)
        lse = jnp.log(jnp.sum(jnp.exp(logits - m), axis=-1, keepdims=True)) + m
        logp_ref[...] = logits - lse

    return kernel


def char_predictor_rnn_forward(tokens, hidden, params):
    """tokens: (B, T) int32, hidden: (L, B, H) f32. Returns (log_probs (B,T,V), hidden (L,B,H))."""
    emb_table = params["embedding"]          # (V, E)
    layer_params = params["gru"]             # per-layer dicts (pre-transposed, gate order r,z,n)
    w_out = params["w_out"]                  # (H, V)
    b_out = params["b_out"]                  # (1, V)

    B, T = tokens.shape
    L, _, H = hidden.shape
    V, _E = emb_table.shape

    Bp = max(8, _round_up(B, 8))             # pad batch to a full sublane group
    Vp = max(128, _round_up(V, 128))         # pad vocab to full lanes (lane-dense logp store)
    GP = max(128, _round_up(3 * H, 128))     # fused-gate lane width (r|z|n packed, zero-padded)

    # Tokens: time-major, batch-padded, (T*Bp, 1) for the in-kernel one-hot embedding matmul.
    tokens_tm = jnp.transpose(tokens, (1, 0)).astype(jnp.int32)         # (T, B)
    tokens_pad = jnp.pad(tokens_tm, ((0, 0), (0, Bp - B)))              # (T, Bp), pad idx 0 valid
    tok_flat = tokens_pad.reshape(T * Bp, 1)

    h0_pad = jnp.pad(hidden, ((0, 0), (0, Bp - B), (0, 0)))             # (L, Bp, H)

    # Parameter prep (constant-folded under jit): fused-gate weights, padded to GP lanes.
    flat_inputs = [tok_flat, h0_pad]
    for l, lp in enumerate(layer_params):
        w_ih, w_hh, b_ih, b_hh = lp["w_ih"], lp["w_hh"], lp["b_ih"], lp["b_hh"]
        # Layer 0: fold the embedding table into the fused input-projection weight -> (V, 3H).
        wx = emb_table @ w_ih if l == 0 else w_ih
        b_x = b_ih + jnp.concatenate(
            [b_hh[:, :2 * H], jnp.zeros((1, H), jnp.float32)], axis=1)   # r/z pre-folded, n=b_ih_n
        b_hn = jnp.concatenate(
            [jnp.zeros((1, 2 * H), jnp.float32), b_hh[:, 2 * H:]], axis=1)
        pad = ((0, 0), (0, GP - 3 * H))
        flat_inputs += [jnp.pad(wx, pad), jnp.pad(w_hh, pad),
                        jnp.pad(b_x, pad), jnp.pad(b_hn, pad)]

    # Output head padded to Vp lanes; padded columns get weight 0 / bias -1e30 so they vanish
    # from the f32 log-softmax and the store is unmasked.
    w_out_p = jnp.pad(w_out, ((0, 0), (0, Vp - V)))
    b_out_p = jnp.concatenate(
        [b_out.astype(jnp.float32), jnp.full((1, Vp - V), -1e30, dtype=jnp.float32)], axis=1)
    flat_inputs += [w_out_p, b_out_p]

    kernel = _make_kernel(L, T, Bp, H, V, GP)
    vmem = pltpu.MemorySpace.VMEM

    logp_flat, h_out = pl.pallas_call(
        kernel,
        out_shape=(
            jax.ShapeDtypeStruct((T * Bp, Vp), jnp.float32),
            jax.ShapeDtypeStruct((L, Bp, H), jnp.float32),
        ),
        in_specs=[pl.BlockSpec(memory_space=vmem)] * len(flat_inputs),
        out_specs=(pl.BlockSpec(memory_space=vmem),
                   pl.BlockSpec(memory_space=vmem)),
        scratch_shapes=[
            pltpu.VMEM((T * Bp, GP), jnp.float32),   # g0_buf : fused layer-0 input projections
            pltpu.VMEM((T * Bp, H), jnp.float32),    # seq_buf: top-layer output sequence
        ],
        input_output_aliases={1: 1},                 # reuse the padded-h0 HBM buffer for h_out
    )(*flat_inputs)

    # Un-pad and restore batch-first layout (cheap: tiny arrays, single pass).
    log_probs = jnp.transpose(logp_flat.reshape(T, Bp, Vp)[:, :B, :V], (1, 0, 2))  # (B, T, V)
    h_final = h_out[:, :B, :]                                                      # (L, B, H)
    return log_probs, h_final


def _reference_forward(tokens, hidden, params):
    """Pure-JAX reference matching PyTorch nn.GRU semantics."""
    emb_table = params["embedding"]
    layer_params = params["gru"]
    w_out = params["w_out"]
    b_out = params["b_out"]
    L, B, H = hidden.shape
    T = tokens.shape[1]

    x_seq = jnp.take(emb_table, tokens, axis=0)   # (B, T, E)
    h = [hidden[l] for l in range(L)]
    outs = []
    for t in range(T):
        x = x_seq[:, t, :]
        for l in range(L):
            lp = layer_params[l]
            gi = x @ lp["w_ih"] + lp["b_ih"]
            gh = h[l] @ lp["w_hh"] + lp["b_hh"]
            r = jax.nn.sigmoid(gi[:, :H] + gh[:, :H])
            z = jax.nn.sigmoid(gi[:, H:2 * H] + gh[:, H:2 * H])
            n = jnp.tanh(gi[:, 2 * H:] + r * gh[:, 2 * H:])
            h[l] = (1.0 - z) * n + z * h[l]
            x = h[l]
        outs.append(x)
    rnn_out = jnp.stack(outs, axis=1)              # (B, T, H)
    logits = rnn_out @ w_out + b_out[None]         # (B, T, V)
    logp = logits - jax.scipy.special.logsumexp(logits, axis=2, keepdims=True)
    return logp, jnp.stack(h, axis=0)


def _init_params(key, vocab_size, embedding_len, hidden_dim, num_layers):
    keys = jax.random.split(key, 3 + 4 * num_layers)
    ki = iter(keys)
    scale = 1.0 / np.sqrt(hidden_dim)
    params = {
        "embedding": jax.random.normal(next(ki), (vocab_size, embedding_len), jnp.float32) * 0.1,
        "gru": [],
        "w_out": jax.random.uniform(next(ki), (hidden_dim, vocab_size), jnp.float32, -scale, scale),
        "b_out": jax.random.uniform(next(ki), (1, vocab_size), jnp.float32, -scale, scale),
    }
    for l in range(num_layers):
        in_dim = embedding_len if l == 0 else hidden_dim
        params["gru"].append({
            # stored pre-transposed: x @ w_ih, h @ w_hh  (gate order r, z, n like PyTorch)
            "w_ih": jax.random.uniform(next(ki), (in_dim, 3 * hidden_dim), jnp.float32, -scale, scale),
            "w_hh": jax.random.uniform(next(ki), (hidden_dim, 3 * hidden_dim), jnp.float32, -scale, scale),
            "b_ih": jax.random.uniform(next(ki), (1, 3 * hidden_dim), jnp.float32, -scale, scale),
            "b_hh": jax.random.uniform(next(ki), (1, 3 * hidden_dim), jnp.float32, -scale, scale),
        })
    return params


if __name__ == "__main__":
    vocab_size, embedding_len, seq_len, hidden_dim, num_layers = 32, 16, 8, 32, 2
    batch = 2

    key = jax.random.PRNGKey(0)
    k_param, k_tok, k_hid = jax.random.split(key, 3)

    params = _init_params(k_param, vocab_size, embedding_len, hidden_dim, num_layers)
    tokens = jax.random.randint(k_tok, (batch, seq_len), 0, vocab_size, dtype=jnp.int32)
    hidden0 = jax.random.normal(k_hid, (num_layers, batch, hidden_dim), jnp.float32)

    fwd = jax.jit(functools.partial(char_predictor_rnn_forward, params=params))
    log_probs, h_final = fwd(tokens, hidden0)
    jax.block_until_ready((log_probs, h_final))

    ref_logp, ref_h = _reference_forward(tokens, hidden0, params)
    np.testing.assert_allclose(np.asarray(log_probs), np.asarray(ref_logp), atol=1e-4, rtol=1e-4)
    np.testing.assert_allclose(np.asarray(h_final), np.asarray(ref_h), atol=1e-4, rtol=1e-4)

    assert log_probs.shape == (batch, seq_len, vocab_size)
    assert h_final.shape == (num_layers, batch, hidden_dim)
    print("KERNEL_OK")
</pallas_src>

<mosaic_0001>
module attributes {stable_mosaic.version = 11 : i64} {
  func.func @kernel(%arg0: memref<64x1xi32, #tpu.memory_space<vmem>>, %arg1: memref<2x8x32xf32, #tpu.memory_space<vmem>>, %arg2: memref<32x128xf32, #tpu.memory_space<vmem>>, %arg3: memref<32x128xf32, #tpu.memory_space<vmem>>, %arg4: memref<1x128xf32, #tpu.memory_space<vmem>>, %arg5: memref<1x128xf32, #tpu.memory_space<vmem>>, %arg6: memref<32x128xf32, #tpu.memory_space<vmem>>, %arg7: memref<32x128xf32, #tpu.memory_space<vmem>>, %arg8: memref<1x128xf32, #tpu.memory_space<vmem>>, %arg9: memref<1x128xf32, #tpu.memory_space<vmem>>, %arg10: memref<32x128xf32, #tpu.memory_space<vmem>>, %arg11: memref<1x128xf32, #tpu.memory_space<vmem>>, %arg12: memref<64x128xf32, #tpu.memory_space<vmem>>, %arg13: memref<2x8x32xf32, #tpu.memory_space<vmem>>, %arg14: memref<64x128xf32, #tpu.memory_space<vmem>>, %arg15: memref<64x32xf32, #tpu.memory_space<vmem>>) attributes {dimension_semantics = [], scalar_prefetch = 0 : i64, scratch_operands = 2 : i64, tpu.core_type = #tpu.core_type<tc>} {
    %c0 = arith.constant 0 : index
    %c0_0 = arith.constant 0 : index
    %0 = vector.load %arg0[%c0, %c0_0] : memref<64x1xi32, #tpu.memory_space<vmem>>, vector<64x1xi32>
    %1 = tpu.iota {dimensions = array<i32: 1>} : vector<64x32xi32>
    %2 = vector.broadcast %0 : vector<64x1xi32> to vector<64x32xi32>
    %3 = arith.cmpi eq, %1, %2 : vector<64x32xi32>
    %4 = arith.extui %3 : vector<64x32xi1> to vector<64x32xi32>
    %5 = arith.sitofp %4 : vector<64x32xi32> to vector<64x32xf32>
    %c0_1 = arith.constant 0 : index
    %c0_2 = arith.constant 0 : index
    %6 = vector.load %arg2[%c0_1, %c0_2] : memref<32x128xf32, #tpu.memory_space<vmem>>, vector<32x128xf32>
    %cst = arith.constant dense<0.000000e+00> : vector<64x128xf32>
    %7 = tpu.matmul %5, %6, %cst {dimension_numbers = #tpu.dot_dimension_numbers<[1], [0], [0], [1], [0, 0, 1, 1], [], []>} : vector<64x32xf32>, vector<32x128xf32>, vector<64x128xf32> -> vector<64x128xf32>
    %c0_3 = arith.constant 0 : index
    %c0_4 = arith.constant 0 : index
    %8 = vector.load %arg4[%c0_3, %c0_4] : memref<1x128xf32, #tpu.memory_space<vmem>>, vector<1x128xf32>
    %9 = vector.broadcast %8 : vector<1x128xf32> to vector<64x128xf32>
    %10 = arith.addf %7, %9 : vector<64x128xf32>
    %c0_5 = arith.constant 0 : index
    %c0_6 = arith.constant 0 : index
    %11 = vector.load %arg14[%c0_5, %c0_6] : memref<64x128xf32, #tpu.memory_space<vmem>>, vector<64x128xf32>
    tpu.vector_store %arg14[%c0_5, %c0_6], %10 {strides = array<i32>} : memref<64x128xf32, #tpu.memory_space<vmem>>, vector<64x128xf32>,
    %c0_7 = arith.constant 0 : index
    %c0_8 = arith.constant 0 : index
    %12 = vector.load %arg3[%c0_7, %c0_8] : memref<32x128xf32, #tpu.memory_space<vmem>>, vector<32x128xf32>
    %c0_9 = arith.constant 0 : index
    %c0_10 = arith.constant 0 : index
    %13 = vector.load %arg7[%c0_9, %c0_10] : memref<32x128xf32, #tpu.memory_space<vmem>>, vector<32x128xf32>
    %c0_11 = arith.constant 0 : index
    %c0_12 = arith.constant 0 : index
    %14 = vector.load %arg5[%c0_11, %c0_12] : memref<1x128xf32, #tpu.memory_space<vmem>>, vector<1x128xf32>
    %15 = vector.shape_cast %14 : vector<1x128xf32> to vector<1x128xf32>
    %16 = vector.broadcast %15 : vector<1x128xf32> to vector<8x128xf32>
    %c0_13 = arith.constant 0 : index
    %c0_14 = arith.constant 0 : index
    %17 = vector.load %arg9[%c0_13, %c0_14] : memref<1x128xf32, #tpu.memory_space<vmem>>, vector<1x128xf32>
    %18 = vector.shape_cast %17 : vector<1x128xf32> to vector<1x128xf32>
    %19 = vector.broadcast %18 : vector<1x128xf32> to vector<8x128xf32>
    %c0_15 = arith.constant 0 : index
    %c0_16 = arith.constant 0 : index
    %20 = vector.load %arg6[%c0_15, %c0_16] : memref<32x128xf32, #tpu.memory_space<vmem>>, vector<32x128xf32>
    %c0_17 = arith.constant 0 : index
    %c0_18 = arith.constant 0 : index
    %21 = vector.load %arg8[%c0_17, %c0_18] : memref<1x128xf32, #tpu.memory_space<vmem>>, vector<1x128xf32>
    %22 = vector.shape_cast %21 : vector<1x128xf32> to vector<1x128xf32>
    %23 = vector.broadcast %22 : vector<1x128xf32> to vector<8x128xf32>
    %c0_19 = arith.constant 0 : index
    %c0_20 = arith.constant 0 : index
    %c0_21 = arith.constant 0 : index
    %24 = vector.load %arg1[%c0_19, %c0_20, %c0_21] : memref<2x8x32xf32, #tpu.memory_space<vmem>>, vector<1x8x32xf32>
    %25 = vector.shape_cast %24 : vector<1x8x32xf32> to vector<8x32xf32>
    %c1 = arith.constant 1 : index
    %c0_22 = arith.constant 0 : index
    %c0_23 = arith.constant 0 : index
    %26 = vector.load %arg1[%c1, %c0_22, %c0_23] : memref<2x8x32xf32, #tpu.memory_space<vmem>>, vector<1x8x32xf32>
    %27 = vector.shape_cast %26 : vector<1x8x32xf32> to vector<8x32xf32>
    %c0_24 = arith.constant 0 : index
    %c0_25 = arith.constant 0 : index
    %28 = vector.load %arg14[%c0_24, %c0_25] : memref<64x128xf32, #tpu.memory_space<vmem>>, vector<8x128xf32>
    %cst_26 = arith.constant dense<0.000000e+00> : vector<8x128xf32>
    %29 = tpu.matmul %25, %12, %cst_26 {dimension_numbers = #tpu.dot_dimension_numbers<[1], [0], [0], [1], [0, 0, 1, 1], [], []>} : vector<8x32xf32>, vector<32x128xf32>, vector<8x128xf32> -> vector<8x128xf32>
    %30 = arith.addf %29, %16 : vector<8x128xf32>
    %31 = arith.addf %28, %30 : vector<8x128xf32>
    %32 = arith.negf %31 : vector<8x128xf32>
    %33 = math.exp %32 : vector<8x128xf32>
    %cst_27 = arith.constant 1.000000e+00 : f32
    %34 = vector.broadcast %cst_27 : f32 to vector<8x128xf32>
    %35 = arith.addf %34, %33 : vector<8x128xf32>
    %36 = arith.divf %34, %35 : vector<8x128xf32>
    %37 = vector.extract_strided_slice %36 {offsets = [0, 0], sizes = [8, 32], strides = [1, 1]} : vector<8x128xf32> to vector<8x32xf32>
    %38 = vector.extract_strided_slice %36 {offsets = [0, 32], sizes = [8, 32], strides = [1, 1]} : vector<8x128xf32> to vector<8x32xf32>
    %39 = vector.extract_strided_slice %28 {offsets = [0, 64], sizes = [8, 32], strides = [1, 1]} : vector<8x128xf32> to vector<8x32xf32>
    %40 = vector.extract_strided_slice %30 {offsets = [0, 64], sizes = [8, 32], strides = [1, 1]} : vector<8x128xf32> to vector<8x32xf32>
    %41 = arith.mulf %37, %40 : vector<8x32xf32>
    %42 = arith.addf %39, %41 : vector<8x32xf32>
    %43 = math.tanh %42 : vector<8x32xf32>
    %44 = arith.subf %25, %43 : vector<8x32xf32>
    %45 = arith.mulf %38, %44 : vector<8x32xf32>
    %46 = arith.addf %43, %45 : vector<8x32xf32>
    %cst_28 = arith.constant dense<0.000000e+00> : vector<8x128xf32>
    %47 = tpu.matmul %46, %20, %cst_28 {dimension_numbers = #tpu.dot_dimension_numbers<[1], [0], [0], [1], [0, 0, 1, 1], [], []>} : vector<8x32xf32>, vector<32x128xf32>, vector<8x128xf32> -> vector<8x128xf32>
    %48 = arith.addf %47, %23 : vector<8x128xf32>
    %cst_29 = arith.constant dense<0.000000e+00> : vector<8x128xf32>
    %49 = tpu.matmul %27, %13, %cst_29 {dimension_numbers = #tpu.dot_dimension_numbers<[1], [0], [0], [1], [0, 0, 1, 1], [], []>} : vector<8x32xf32>, vector<32x128xf32>, vector<8x128xf32> -> vector<8x128xf32>
    %50 = arith.addf %49, %19 : vector<8x128xf32>
    %51 = arith.addf %48, %50 : vector<8x128xf32>
    %52 = arith.negf %51 : vector<8x128xf32>
    %53 = math.exp %52 : vector<8x128xf32>
    %cst_30 = arith.constant 1.000000e+00 : f32
    %54 = vector.broadcast %cst_30 : f32 to vector<8x128xf32>
    %55 = arith.addf %54, %53 : vector<8x128xf32>
    %56 = arith.divf %54, %55 : vector<8x128xf32>
    %57 = vector.extract_strided_slice %56 {offsets = [0, 0], sizes = [8, 32], strides = [1, 1]} : vector<8x128xf32> to vector<8x32xf32>
    %58 = vector.extract_strided_slice %56 {offsets = [0, 32], sizes = [8, 32], strides = [1, 1]} : vector<8x128xf32> to vector<8x32xf32>
    %59 = vector.extract_strided_slice %48 {offsets = [0, 64], sizes = [8, 32], strides = [1, 1]} : vector<8x128xf32> to vector<8x32xf32>
    %60 = vector.extract_strided_slice %50 {offsets = [0, 64], sizes = [8, 32], strides = [1, 1]} : vector<8x128xf32> to vector<8x32xf32>
    %61 = arith.mulf %57, %60 : vector<8x32xf32>
    %62 = arith.addf %59, %61 : vector<8x32xf32>
    %63 = math.tanh %62 : vector<8x32xf32>
    %64 = arith.subf %27, %63 : vector<8x32xf32>
    %65 = arith.mulf %58, %64 : vector<8x32xf32>
    %66 = arith.addf %63, %65 : vector<8x32xf32>
    %c0_31 = arith.constant 0 : index
    %c0_32 = arith.constant 0 : index
    %67 = vector.load %arg15[%c0_31, %c0_32] : memref<64x32xf32, #tpu.memory_space<vmem>>, vector<8x32xf32>
    tpu.vector_store %arg15[%c0_31, %c0_32], %66 {strides = array<i32>} : memref<64x32xf32, #tpu.memory_space<vmem>>, vector<8x32xf32>,
    %c8 = arith.constant 8 : index
    %c0_33 = arith.constant 0 : index
    %68 = vector.load %arg14[%c8, %c0_33] : memref<64x128xf32, #tpu.memory_space<vmem>>, vector<8x128xf32>
    %cst_34 = arith.constant dense<0.000000e+00> : vector<8x128xf32>
    %69 = tpu.matmul %46, %12, %cst_34 {dimension_numbers = #tpu.dot_dimension_numbers<[1], [0], [0], [1], [0, 0, 1, 1], [], []>} : vector<8x32xf32>, vector<32x128xf32>, vector<8x128xf32> -> vector<8x128xf32>
    %70 = arith.addf %69, %16 : vector<8x128xf32>
    %71 = arith.addf %68, %70 : vector<8x128xf32>
    %72 = arith.negf %71 : vector<8x128xf32>
    %73 = math.exp %72 : vector<8x128xf32>
    %cst_35 = arith.constant 1.000000e+00 : f32
    %74 = vector.broadcast %cst_35 : f32 to vector<8x128xf32>
    %75 = arith.addf %74, %73 : vector<8x128xf32>
    %76 = arith.divf %74, %75 : vector<8x128xf32>
    %77 = vector.extract_strided_slice %76 {offsets = [0, 0], sizes = [8, 32], strides = [1, 1]} : vector<8x128xf32> to vector<8x32xf32>
    %78 = vector.extract_strided_slice %76 {offsets = [0, 32], sizes = [8, 32], strides = [1, 1]} : vector<8x128xf32> to vector<8x32xf32>
    %79 = vector.extract_strided_slice %68 {offsets = [0, 64], sizes = [8, 32], strides = [1, 1]} : vector<8x128xf32> to vector<8x32xf32>
    %80 = vector.extract_strided_slice %70 {offsets = [0, 64], sizes = [8, 32], strides = [1, 1]} : vector<8x128xf32> to vector<8x32xf32>
    %81 = arith.mulf %77, %80 : vector<8x32xf32>
    %82 = arith.addf %79, %81 : vector<8x32xf32>
    %83 = math.tanh %82 : vector<8x32xf32>
    %84 = arith.subf %46, %83 : vector<8x32xf32>
    %85 = arith.mulf %78, %84 : vector<8x32xf32>
    %86 = arith.addf %83, %85 : vector<8x32xf32>
    %cst_36 = arith.constant dense<0.000000e+00> : vector<8x128xf32>
    %87 = tpu.matmul %86, %20, %cst_36 {dimension_numbers = #tpu.dot_dimension_numbers<[1], [0], [0], [1], [0, 0, 1, 1], [], []>} : vector<8x32xf32>, vector<32x128xf32>, vector<8x128xf32> -> vector<8x128xf32>
    %88 = arith.addf %87, %23 : vector<8x128xf32>
    %cst_37 = arith.constant dense<0.000000e+00> : vector<8x128xf32>
    %89 = tpu.matmul %66, %13, %cst_37 {dimension_numbers = #tpu.dot_dimension_numbers<[1], [0], [0], [1], [0, 0, 1, 1], [], []>} : vector<8x32xf32>, vector<32x128xf32>, vector<8x128xf32> -> vector<8x128xf32>
    %90 = arith.addf %89, %19 : vector<8x128xf32>
    %91 = arith.addf %88, %90 : vector<8x128xf32>
    %92 = arith.negf %91 : vector<8x128xf32>
    %93 = math.exp %92 : vector<8x128xf32>
    %cst_38 = arith.constant 1.000000e+00 : f32
    %94 = vector.broadcast %cst_38 : f32 to vector<8x128xf32>
    %95 = arith.addf %94, %93 : vector<8x128xf32>
    %96 = arith.divf %94, %95 : vector<8x128xf32>
    %97 = vector.extract_strided_slice %96 {offsets = [0, 0], sizes = [8, 32], strides = [1, 1]} : vector<8x128xf32> to vector<8x32xf32>
    %98 = vector.extract_strided_slice %96 {offsets = [0, 32], sizes = [8, 32], strides = [1, 1]} : vector<8x128xf32> to vector<8x32xf32>
    %99 = vector.extract_strided_slice %88 {offsets = [0, 64], sizes = [8, 32], strides = [1, 1]} : vector<8x128xf32> to vector<8x32xf32>
    %100 = vector.extract_strided_slice %90 {offsets = [0, 64], sizes = [8, 32], strides = [1, 1]} : vector<8x128xf32> to vector<8x32xf32>
    %101 = arith.mulf %97, %100 : vector<8x32xf32>
    %102 = arith.addf %99, %101 : vector<8x32xf32>
    %103 = math.tanh %102 : vector<8x32xf32>
    %104 = arith.subf %66, %103 : vector<8x32xf32>
    %105 = arith.mulf %98, %104 : vector<8x32xf32>
    %106 = arith.addf %103, %105 : vector<8x32xf32>
    %c8_39 = arith.constant 8 : index
    %c0_40 = arith.constant 0 : index
    %107 = vector.load %arg15[%c8_39, %c0_40] : memref<64x32xf32, #tpu.memory_space<vmem>>, vector<8x32xf32>
    tpu.vector_store %arg15[%c8_39, %c0_40], %106 {strides = array<i32>} : memref<64x32xf32, #tpu.memory_space<vmem>>, vector<8x32xf32>,
    %c16 = arith.constant 16 : index
    %c0_41 = arith.constant 0 : index
    %108 = vector.load %arg14[%c16, %c0_41] : memref<64x128xf32, #tpu.memory_space<vmem>>, vector<8x128xf32>
    %cst_42 = arith.constant dense<0.000000e+00> : vector<8x128xf32>
    %109 = tpu.matmul %86, %12, %cst_42 {dimension_numbers = #tpu.dot_dimension_numbers<[1], [0], [0], [1], [0, 0, 1, 1], [], []>} : vector<8x32xf32>, vector<32x128xf32>, vector<8x128xf32> -> vector<8x128xf32>
    %110 = arith.addf %109, %16 : vector<8x128xf32>
    %111 = arith.addf %108, %110 : vector<8x128xf32>
    %112 = arith.negf %111 : vector<8x128xf32>
    %113 = math.exp %112 : vector<8x128xf32>
    %cst_43 = arith.constant 1.000000e+00 : f32
    %114 = vector.broadcast %cst_43 : f32 to vector<8x128xf32>
    %115 = arith.addf %114, %113 : vector<8x128xf32>
    %116 = arith.divf %114, %115 : vector<8x128xf32>
    %117 = vector.extract_strided_slice %116 {offsets = [0, 0], sizes = [8, 32], strides = [1, 1]} : vector<8x128xf32> to vector<8x32xf32>
    %118 = vector.extract_strided_slice %116 {offsets = [0, 32], sizes = [8, 32], strides = [1, 1]} : vector<8x128xf32> to vector<8x32xf32>
    %119 = vector.extract_strided_slice %108 {offsets = [0, 64], sizes = [8, 32], strides = [1, 1]} : vector<8x128xf32> to vector<8x32xf32>
    %120 = vector.extract_strided_slice %110 {offsets = [0, 64], sizes = [8, 32], strides = [1, 1]} : vector<8x128xf32> to vector<8x32xf32>
    %121 = arith.mulf %117, %120 : vector<8x32xf32>
    %122 = arith.addf %119, %121 : vector<8x32xf32>
    %123 = math.tanh %122 : vector<8x32xf32>
    %124 = arith.subf %86, %123 : vector<8x32xf32>
    %125 = arith.mulf %118, %124 : vector<8x32xf32>
    %126 = arith.addf %123, %125 : vector<8x32xf32>
    %cst_44 = arith.constant dense<0.000000e+00> : vector<8x128xf32>
    %127 = tpu.matmul %126, %20, %cst_44 {dimension_numbers = #tpu.dot_dimension_numbers<[1], [0], [0], [1], [0, 0, 1, 1], [], []>} : vector<8x32xf32>, vector<32x128xf32>, vector<8x128xf32> -> vector<8x128xf32>
    %128 = arith.addf %127, %23 : vector<8x128xf32>
    %cst_45 = arith.constant dense<0.000000e+00> : vector<8x128xf32>
    %129 = tpu.matmul %106, %13, %cst_45 {dimension_numbers = #tpu.dot_dimension_numbers<[1], [0], [0], [1], [0, 0, 1, 1], [], []>} : vector<8x32xf32>, vector<32x128xf32>, vector<8x128xf32> -> vector<8x128xf32>
    %130 = arith.addf %129, %19 : vector<8x128xf32>
    %131 = arith.addf %128, %130 : vector<8x128xf32>
    %132 = arith.negf %131 : vector<8x128xf32>
    %133 = math.exp %132 : vector<8x128xf32>
    %cst_46 = arith.constant 1.000000e+00 : f32
    %134 = vector.broadcast %cst_46 : f32 to vector<8x128xf32>
    %135 = arith.addf %134, %133 : vector<8x128xf32>
    %136 = arith.divf %134, %135 : vector<8x128xf32>
    %137 = vector.extract_strided_slice %136 {offsets = [0, 0], sizes = [8, 32], strides = [1, 1]} : vector<8x128xf32> to vector<8x32xf32>
    %138 = vector.extract_strided_slice %136 {offsets = [0, 32], sizes = [8, 32], strides = [1, 1]} : vector<8x128xf32> to vector<8x32xf32>
    %139 = vector.extract_strided_slice %128 {offsets = [0, 64], sizes = [8, 32], strides = [1, 1]} : vector<8x128xf32> to vector<8x32xf32>
    %140 = vector.extract_strided_slice %130 {offsets = [0, 64], sizes = [8, 32], strides = [1, 1]} : vector<8x128xf32> to vector<8x32xf32>
    %141 = arith.mulf %137, %140 : vector<8x32xf32>
    %142 = arith.addf %139, %141 : vector<8x32xf32>
    %143 = math.tanh %142 : vector<8x32xf32>
    %144 = arith.subf %106, %143 : vector<8x32xf32>
    %145 = arith.mulf %138, %144 : vector<8x32xf32>
    %146 = arith.addf %143, %145 : vector<8x32xf32>
    %c16_47 = arith.constant 16 : index
    %c0_48 = arith.constant 0 : index
    %147 = vector.load %arg15[%c16_47, %c0_48] : memref<64x32xf32, #tpu.memory_space<vmem>>, vector<8x32xf32>
    tpu.vector_store %arg15[%c16_47, %c0_48], %146 {strides = array<i32>} : memref<64x32xf32, #tpu.memory_space<vmem>>, vector<8x32xf32>,
    %c24 = arith.constant 24 : index
    %c0_49 = arith.constant 0 : index
    %148 = vector.load %arg14[%c24, %c0_49] : memref<64x128xf32, #tpu.memory_space<vmem>>, vector<8x128xf32>
    %cst_50 = arith.constant dense<0.000000e+00> : vector<8x128xf32>
    %149 = tpu.matmul %126, %12, %cst_50 {dimension_numbers = #tpu.dot_dimension_numbers<[1], [0], [0], [1], [0, 0, 1, 1], [], []>} : vector<8x32xf32>, vector<32x128xf32>, vector<8x128xf32> -> vector<8x128xf32>
    %150 = arith.addf %149, %16 : vector<8x128xf32>
    %151 = arith.addf %148, %150 : vector<8x128xf32>
    %152 = arith.negf %151 : vector<8x128xf32>
    %153 = math.exp %152 : vector<8x128xf32>
    %cst_51 = arith.constant 1.000000e+00 : f32
    %154 = vector.broadcast %cst_51 : f32 to vector<8x128xf32>
    %155 = arith.addf %154, %153 : vector<8x128xf32>
    %156 = arith.divf %154, %155 : vector<8x128xf32>
    %157 = vector.extract_strided_slice %156 {offsets = [0, 0], sizes = [8, 32], strides = [1, 1]} : vector<8x128xf32> to vector<8x32xf32>
    %158 = vector.extract_strided_slice %156 {offsets = [0, 32], sizes = [8, 32], strides = [1, 1]} : vector<8x128xf32> to vector<8x32xf32>
    %159 = vector.extract_strided_slice %148 {offsets = [0, 64], sizes = [8, 32], strides = [1, 1]} : vector<8x128xf32> to vector<8x32xf32>
    %160 = vector.extract_strided_slice %150 {offsets = [0, 64], sizes = [8, 32], strides = [1, 1]} : vector<8x128xf32> to vector<8x32xf32>
    %161 = arith.mulf %157, %160 : vector<8x32xf32>
    %162 = arith.addf %159, %161 : vector<8x32xf32>
    %163 = math.tanh %162 : vector<8x32xf32>
    %164 = arith.subf %126, %163 : vector<8x32xf32>
    %165 = arith.mulf %158, %164 : vector<8x32xf32>
    %166 = arith.addf %163, %165 : vector<8x32xf32>
    %cst_52 = arith.constant dense<0.000000e+00> : vector<8x128xf32>
    %167 = tpu.matmul %166, %20, %cst_52 {dimension_numbers = #tpu.dot_dimension_numbers<[1], [0], [0], [1], [0, 0, 1, 1], [], []>} : vector<8x32xf32>, vector<32x128xf32>, vector<8x128xf32> -> vector<8x128xf32>
    %168 = arith.addf %167, %23 : vector<8x128xf32>
    %cst_53 = arith.constant dense<0.000000e+00> : vector<8x128xf32>
    %169 = tpu.matmul %146, %13, %cst_53 {dimension_numbers = #tpu.dot_dimension_numbers<[1], [0], [0], [1], [0, 0, 1, 1], [], []>} : vector<8x32xf32>, vector<32x128xf32>, vector<8x128xf32> -> vector<8x128xf32>
    %170 = arith.addf %169, %19 : vector<8x128xf32>
    %171 = arith.addf %168, %170 : vector<8x128xf32>
    %172 = arith.negf %171 : vector<8x128xf32>
    %173 = math.exp %172 : vector<8x128xf32>
    %cst_54 = arith.constant 1.000000e+00 : f32
    %174 = vector.broadcast %cst_54 : f32 to vector<8x128xf32>
    %175 = arith.addf %174, %173 : vector<8x128xf32>
    %176 = arith.divf %174, %175 : vector<8x128xf32>
    %177 = vector.extract_strided_slice %176 {offsets = [0, 0], sizes = [8, 32], strides = [1, 1]} : vector<8x128xf32> to vector<8x32xf32>
    %178 = vector.extract_strided_slice %176 {offsets = [0, 32], sizes = [8, 32], strides = [1, 1]} : vector<8x128xf32> to vector<8x32xf32>
    %179 = vector.extract_strided_slice %168 {offsets = [0, 64], sizes = [8, 32], strides = [1, 1]} : vector<8x128xf32> to vector<8x32xf32>
    %180 = vector.extract_strided_slice %170 {offsets = [0, 64], sizes = [8, 32], strides = [1, 1]} : vector<8x128xf32> to vector<8x32xf32>
    %181 = arith.mulf %177, %180 : vector<8x32xf32>
    %182 = arith.addf %179, %181 : vector<8x32xf32>
    %183 = math.tanh %182 : vector<8x32xf32>
    %184 = arith.subf %146, %183 : vector<8x32xf32>
    %185 = arith.mulf %178, %184 : vector<8x32xf32>
    %186 = arith.addf %183, %185 : vector<8x32xf32>
    %c24_55 = arith.constant 24 : index
    %c0_56 = arith.constant 0 : index
    %187 = vector.load %arg15[%c24_55, %c0_56] : memref<64x32xf32, #tpu.memory_space<vmem>>, vector<8x32xf32>
    tpu.vector_store %arg15[%c24_55, %c0_56], %186 {strides = array<i32>} : memref<64x32xf32, #tpu.memory_space<vmem>>, vector<8x32xf32>,
    %c32 = arith.constant 32 : index
    %c0_57 = arith.constant 0 : index
    %188 = vector.load %arg14[%c32, %c0_57] : memref<64x128xf32, #tpu.memory_space<vmem>>, vector<8x128xf32>
    %cst_58 = arith.constant dense<0.000000e+00> : vector<8x128xf32>
    %189 = tpu.matmul %166, %12, %cst_58 {dimension_numbers = #tpu.dot_dimension_numbers<[1], [0], [0], [1], [0, 0, 1, 1], [], []>} : vector<8x32xf32>, vector<32x128xf32>, vector<8x128xf32> -> vector<8x128xf32>
    %190 = arith.addf %189, %16 : vector<8x128xf32>
    %191 = arith.addf %188, %190 : vector<8x128xf32>
    %192 = arith.negf %191 : vector<8x128xf32>
    %193 = math.exp %192 : vector<8x128xf32>
    %cst_59 = arith.constant 1.000000e+00 : f32
    %194 = vector.broadcast %cst_59 : f32 to vector<8x128xf32>
    %195 = arith.addf %194, %193 : vector<8x128xf32>
    %196 = arith.divf %194, %195 : vector<8x128xf32>
    %197 = vector.extract_strided_slice %196 {offsets = [0, 0], sizes = [8, 32], strides = [1, 1]} : vector<8x128xf32> to vector<8x32xf32>
    %198 = vector.extract_strided_slice %196 {offsets = [0, 32], sizes = [8, 32], strides = [1, 1]} : vector<8x128xf32> to vector<8x32xf32>
    %199 = vector.extract_strided_slice %188 {offsets = [0, 64], sizes = [8, 32], strides = [1, 1]} : vector<8x128xf32> to vector<8x32xf32>
    %200 = vector.extract_strided_slice %190 {offsets = [0, 64], sizes = [8, 32], strides = [1, 1]} : vector<8x128xf32> to vector<8x32xf32>
    %201 = arith.mulf %197, %200 : vector<8x32xf32>
    %202 = arith.addf %199, %201 : vector<8x32xf32>
    %203 = math.tanh %202 : vector<8x32xf32>
    %204 = arith.subf %166, %203 : vector<8x32xf32>
    %205 = arith.mulf %198, %204 : vector<8x32xf32>
    %206 = arith.addf %203, %205 : vector<8x32xf32>
    %cst_60 = arith.constant dense<0.000000e+00> : vector<8x128xf32>
    %207 = tpu.matmul %206, %20, %cst_60 {dimension_numbers = #tpu.dot_dimension_numbers<[1], [0], [0], [1], [0, 0, 1, 1], [], []>} : vector<8x32xf32>, vector<32x128xf32>, vector<8x128xf32> -> vector<8x128xf32>
    %208 = arith.addf %207, %23 : vector<8x128xf32>
    %cst_61 = arith.constant dense<0.000000e+00> : vector<8x128xf32>
    %209 = tpu.matmul %186, %13, %cst_61 {dimension_numbers = #tpu.dot_dimension_numbers<[1], [0], [0], [1], [0, 0, 1, 1], [], []>} : vector<8x32xf32>, vector<32x128xf32>, vector<8x128xf32> -> vector<8x128xf32>
    %210 = arith.addf %209, %19 : vector<8x128xf32>
    %211 = arith.addf %208, %210 : vector<8x128xf32>
    %212 = arith.negf %211 : vector<8x128xf32>
    %213 = math.exp %212 : vector<8x128xf32>
    %cst_62 = arith.constant 1.000000e+00 : f32
    %214 = vector.broadcast %cst_62 : f32 to vector<8x128xf32>
    %215 = arith.addf %214, %213 : vector<8x128xf32>
    %216 = arith.divf %214, %215 : vector<8x128xf32>
    %217 = vector.extract_strided_slice %216 {offsets = [0, 0], sizes = [8, 32], strides = [1, 1]} : vector<8x128xf32> to vector<8x32xf32>
    %218 = vector.extract_strided_slice %216 {offsets = [0, 32], sizes = [8, 32], strides = [1, 1]} : vector<8x128xf32> to vector<8x32xf32>
    %219 = vector.extract_strided_slice %208 {offsets = [0, 64], sizes = [8, 32], strides = [1, 1]} : vector<8x128xf32> to vector<8x32xf32>
    %220 = vector.extract_strided_slice %210 {offsets = [0, 64], sizes = [8, 32], strides = [1, 1]} : vector<8x128xf32> to vector<8x32xf32>
    %221 = arith.mulf %217, %220 : vector<8x32xf32>
    %222 = arith.addf %219, %221 : vector<8x32xf32>
    %223 = math.tanh %222 : vector<8x32xf32>
    %224 = arith.subf %186, %223 : vector<8x32xf32>
    %225 = arith.mulf %218, %224 : vector<8x32xf32>
    %226 = arith.addf %223, %225 : vector<8x32xf32>
    %c32_63 = arith.constant 32 : index
    %c0_64 = arith.constant 0 : index
    %227 = vector.load %arg15[%c32_63, %c0_64] : memref<64x32xf32, #tpu.memory_space<vmem>>, vector<8x32xf32>
    tpu.vector_store %arg15[%c32_63, %c0_64], %226 {strides = array<i32>} : memref<64x32xf32, #tpu.memory_space<vmem>>, vector<8x32xf32>,
    %c40 = arith.constant 40 : index
    %c0_65 = arith.constant 0 : index
    %228 = vector.load %arg14[%c40, %c0_65] : memref<64x128xf32, #tpu.memory_space<vmem>>, vector<8x128xf32>
    %cst_66 = arith.constant dense<0.000000e+00> : vector<8x128xf32>
    %229 = tpu.matmul %206, %12, %cst_66 {dimension_numbers = #tpu.dot_dimension_numbers<[1], [0], [0], [1], [0, 0, 1, 1], [], []>} : vector<8x32xf32>, vector<32x128xf32>, vector<8x128xf32> -> vector<8x128xf32>
    %230 = arith.addf %229, %16 : vector<8x128xf32>
    %231 = arith.addf %228, %230 : vector<8x128xf32>
    %232 = arith.negf %231 : vector<8x128xf32>
    %233 = math.exp %232 : vector<8x128xf32>
    %cst_67 = arith.constant 1.000000e+00 : f32
    %234 = vector.broadcast %cst_67 : f32 to vector<8x128xf32>
    %235 = arith.addf %234, %233 : vector<8x128xf32>
    %236 = arith.divf %234, %235 : vector<8x128xf32>
    %237 = vector.extract_strided_slice %236 {offsets = [0, 0], sizes = [8, 32], strides = [1, 1]} : vector<8x128xf32> to vector<8x32xf32>
    %238 = vector.extract_strided_slice %236 {offsets = [0, 32], sizes = [8, 32], strides = [1, 1]} : vector<8x128xf32> to vector<8x32xf32>
    %239 = vector.extract_strided_slice %228 {offsets = [0, 64], sizes = [8, 32], strides = [1, 1]} : vector<8x128xf32> to vector<8x32xf32>
    %240 = vector.extract_strided_slice %230 {offsets = [0, 64], sizes = [8, 32], strides = [1, 1]} : vector<8x128xf32> to vector<8x32xf32>
    %241 = arith.mulf %237, %240 : vector<8x32xf32>
    %242 = arith.addf %239, %241 : vector<8x32xf32>
    %243 = math.tanh %242 : vector<8x32xf32>
    %244 = arith.subf %206, %243 : vector<8x32xf32>
    %245 = arith.mulf %238, %244 : vector<8x32xf32>
    %246 = arith.addf %243, %245 : vector<8x32xf32>
    %cst_68 = arith.constant dense<0.000000e+00> : vector<8x128xf32>
    %247 = tpu.matmul %246, %20, %cst_68 {dimension_numbers = #tpu.dot_dimension_numbers<[1], [0], [0], [1], [0, 0, 1, 1], [], []>} : vector<8x32xf32>, vector<32x128xf32>, vector<8x128xf32> -> vector<8x128xf32>
    %248 = arith.addf %247, %23 : vector<8x128xf32>
    %cst_69 = arith.constant dense<0.000000e+00> : vector<8x128xf32>
    %249 = tpu.matmul %226, %13, %cst_69 {dimension_numbers = #tpu.dot_dimension_numbers<[1], [0], [0], [1], [0, 0, 1, 1], [], []>} : vector<8x32xf32>, vector<32x128xf32>, vector<8x128xf32> -> vector<8x128xf32>
    %250 = arith.addf %249, %19 : vector<8x128xf32>
    %251 = arith.addf %248, %250 : vector<8x128xf32>
    %252 = arith.negf %251 : vector<8x128xf32>
    %253 = math.exp %252 : vector<8x128xf32>
    %cst_70 = arith.constant 1.000000e+00 : f32
    %254 = vector.broadcast %cst_70 : f32 to vector<8x128xf32>
    %255 = arith.addf %254, %253 : vector<8x128xf32>
    %256 = arith.divf %254, %255 : vector<8x128xf32>
    %257 = vector.extract_strided_slice %256 {offsets = [0, 0], sizes = [8, 32], strides = [1, 1]} : vector<8x128xf32> to vector<8x32xf32>
    %258 = vector.extract_strided_slice %256 {offsets = [0, 32], sizes = [8, 32], strides = [1, 1]} : vector<8x128xf32> to vector<8x32xf32>
    %259 = vector.extract_strided_slice %248 {offsets = [0, 64], sizes = [8, 32], strides = [1, 1]} : vector<8x128xf32> to vector<8x32xf32>
    %260 = vector.extract_strided_slice %250 {offsets = [0, 64], sizes = [8, 32], strides = [1, 1]} : vector<8x128xf32> to vector<8x32xf32>
    %261 = arith.mulf %257, %260 : vector<8x32xf32>
    %262 = arith.addf %259, %261 : vector<8x32xf32>
    %263 = math.tanh %262 : vector<8x32xf32>
    %264 = arith.subf %226, %263 : vector<8x32xf32>
    %265 = arith.mulf %258, %264 : vector<8x32xf32>
    %266 = arith.addf %263, %265 : vector<8x32xf32>
    %c40_71 = arith.constant 40 : index
    %c0_72 = arith.constant 0 : index
    %267 = vector.load %arg15[%c40_71, %c0_72] : memref<64x32xf32, #tpu.memory_space<vmem>>, vector<8x32xf32>
    tpu.vector_store %arg15[%c40_71, %c0_72], %266 {strides = array<i32>} : memref<64x32xf32, #tpu.memory_space<vmem>>, vector<8x32xf32>,
    %c48 = arith.constant 48 : index
    %c0_73 = arith.constant 0 : index
    %268 = vector.load %arg14[%c48, %c0_73] : memref<64x128xf32, #tpu.memory_space<vmem>>, vector<8x128xf32>
    %cst_74 = arith.constant dense<0.000000e+00> : vector<8x128xf32>
    %269 = tpu.matmul %246, %12, %cst_74 {dimension_numbers = #tpu.dot_dimension_numbers<[1], [0], [0], [1], [0, 0, 1, 1], [], []>} : vector<8x32xf32>, vector<32x128xf32>, vector<8x128xf32> -> vector<8x128xf32>
    %270 = arith.addf %269, %16 : vector<8x128xf32>
    %271 = arith.addf %268, %270 : vector<8x128xf32>
    %272 = arith.negf %271 : vector<8x128xf32>
    %273 = math.exp %272 : vector<8x128xf32>
    %cst_75 = arith.constant 1.000000e+00 : f32
    %274 = vector.broadcast %cst_75 : f32 to vector<8x128xf32>
    %275 = arith.addf %274, %273 : vector<8x128xf32>
    %276 = arith.divf %274, %275 : vector<8x128xf32>
    %277 = vector.extract_strided_slice %276 {offsets = [0, 0], sizes = [8, 32], strides = [1, 1]} : vector<8x128xf32> to vector<8x32xf32>
    %278 = vector.extract_strided_slice %276 {offsets = [0, 32], sizes = [8, 32], strides = [1, 1]} : vector<8x128xf32> to vector<8x32xf32>
    %279 = vector.extract_strided_slice %268 {offsets = [0, 64], sizes = [8, 32], strides = [1, 1]} : vector<8x128xf32> to vector<8x32xf32>
    %280 = vector.extract_strided_slice %270 {offsets = [0, 64], sizes = [8, 32], strides = [1, 1]} : vector<8x128xf32> to vector<8x32xf32>
    %281 = arith.mulf %277, %280 : vector<8x32xf32>
    %282 = arith.addf %279, %281 : vector<8x32xf32>
    %283 = math.tanh %282 : vector<8x32xf32>
    %284 = arith.subf %246, %283 : vector<8x32xf32>
    %285 = arith.mulf %278, %284 : vector<8x32xf32>
    %286 = arith.addf %283, %285 : vector<8x32xf32>
    %cst_76 = arith.constant dense<0.000000e+00> : vector<8x128xf32>
    %287 = tpu.matmul %286, %20, %cst_76 {dimension_numbers = #tpu.dot_dimension_numbers<[1], [0], [0], [1], [0, 0, 1, 1], [], []>} : vector<8x32xf32>, vector<32x128xf32>, vector<8x128xf32> -> vector<8x128xf32>
    %288 = arith.addf %287, %23 : vector<8x128xf32>
    %cst_77 = arith.constant dense<0.000000e+00> : vector<8x128xf32>
    %289 = tpu.matmul %266, %13, %cst_77 {dimension_numbers = #tpu.dot_dimension_numbers<[1], [0], [0], [1], [0, 0, 1, 1], [], []>} : vector<8x32xf32>, vector<32x128xf32>, vector<8x128xf32> -> vector<8x128xf32>
    %290 = arith.addf %289, %19 : vector<8x128xf32>
    %291 = arith.addf %288, %290 : vector<8x128xf32>
    %292 = arith.negf %291 : vector<8x128xf32>
    %293 = math.exp %292 : vector<8x128xf32>
    %cst_78 = arith.constant 1.000000e+00 : f32
    %294 = vector.broadcast %cst_78 : f32 to vector<8x128xf32>
    %295 = arith.addf %294, %293 : vector<8x128xf32>
    %296 = arith.divf %294, %295 : vector<8x128xf32>
    %297 = vector.extract_strided_slice %296 {offsets = [0, 0], sizes = [8, 32], strides = [1, 1]} : vector<8x128xf32> to vector<8x32xf32>
    %298 = vector.extract_strided_slice %296 {offsets = [0, 32], sizes = [8, 32], strides = [1, 1]} : vector<8x128xf32> to vector<8x32xf32>
    %299 = vector.extract_strided_slice %288 {offsets = [0, 64], sizes = [8, 32], strides = [1, 1]} : vector<8x128xf32> to vector<8x32xf32>
    %300 = vector.extract_strided_slice %290 {offsets = [0, 64], sizes = [8, 32], strides = [1, 1]} : vector<8x128xf32> to vector<8x32xf32>
    %301 = arith.mulf %297, %300 : vector<8x32xf32>
    %302 = arith.addf %299, %301 : vector<8x32xf32>
    %303 = math.tanh %302 : vector<8x32xf32>
    %304 = arith.subf %266, %303 : vector<8x32xf32>
    %305 = arith.mulf %298, %304 : vector<8x32xf32>
    %306 = arith.addf %303, %305 : vector<8x32xf32>
    %c48_79 = arith.constant 48 : index
    %c0_80 = arith.constant 0 : index
    %307 = vector.load %arg15[%c48_79, %c0_80] : memref<64x32xf32, #tpu.memory_space<vmem>>, vector<8x32xf32>
    tpu.vector_store %arg15[%c48_79, %c0_80], %306 {strides = array<i32>} : memref<64x32xf32, #tpu.memory_space<vmem>>, vector<8x32xf32>,
    %c56 = arith.constant 56 : index
    %c0_81 = arith.constant 0 : index
    %308 = vector.load %arg14[%c56, %c0_81] : memref<64x128xf32, #tpu.memory_space<vmem>>, vector<8x128xf32>
    %cst_82 = arith.constant dense<0.000000e+00> : vector<8x128xf32>
    %309 = tpu.matmul %286, %12, %cst_82 {dimension_numbers = #tpu.dot_dimension_numbers<[1], [0], [0], [1], [0, 0, 1, 1], [], []>} : vector<8x32xf32>, vector<32x128xf32>, vector<8x128xf32> -> vector<8x128xf32>
    %310 = arith.addf %309, %16 : vector<8x128xf32>
    %311 = arith.addf %308, %310 : vector<8x128xf32>
    %312 = arith.negf %311 : vector<8x128xf32>
    %313 = math.exp %312 : vector<8x128xf32>
    %cst_83 = arith.constant 1.000000e+00 : f32
    %314 = vector.broadcast %cst_83 : f32 to vector<8x128xf32>
    %315 = arith.addf %314, %313 : vector<8x128xf32>
    %316 = arith.divf %314, %315 : vector<8x128xf32>
    %317 = vector.extract_strided_slice %316 {offsets = [0, 0], sizes = [8, 32], strides = [1, 1]} : vector<8x128xf32> to vector<8x32xf32>
    %318 = vector.extract_strided_slice %316 {offsets = [0, 32], sizes = [8, 32], strides = [1, 1]} : vector<8x128xf32> to vector<8x32xf32>
    %319 = vector.extract_strided_slice %308 {offsets = [0, 64], sizes = [8, 32], strides = [1, 1]} : vector<8x128xf32> to vector<8x32xf32>
    %320 = vector.extract_strided_slice %310 {offsets = [0, 64], sizes = [8, 32], strides = [1, 1]} : vector<8x128xf32> to vector<8x32xf32>
    %321 = arith.mulf %317, %320 : vector<8x32xf32>
    %322 = arith.addf %319, %321 : vector<8x32xf32>
    %323 = math.tanh %322 : vector<8x32xf32>
    %324 = arith.subf %286, %323 : vector<8x32xf32>
    %325 = arith.mulf %318, %324 : vector<8x32xf32>
    %326 = arith.addf %323, %325 : vector<8x32xf32>
    %cst_84 = arith.constant dense<0.000000e+00> : vector<8x128xf32>
    %327 = tpu.matmul %326, %20, %cst_84 {dimension_numbers = #tpu.dot_dimension_numbers<[1], [0], [0], [1], [0, 0, 1, 1], [], []>} : vector<8x32xf32>, vector<32x128xf32>, vector<8x128xf32> -> vector<8x128xf32>
    %328 = arith.addf %327, %23 : vector<8x128xf32>
    %cst_85 = arith.constant dense<0.000000e+00> : vector<8x128xf32>
    %329 = tpu.matmul %306, %13, %cst_85 {dimension_numbers = #tpu.dot_dimension_numbers<[1], [0], [0], [1], [0, 0, 1, 1], [], []>} : vector<8x32xf32>, vector<32x128xf32>, vector<8x128xf32> -> vector<8x128xf32>
    %330 = arith.addf %329, %19 : vector<8x128xf32>
    %331 = arith.addf %328, %330 : vector<8x128xf32>
    %332 = arith.negf %331 : vector<8x128xf32>
    %333 = math.exp %332 : vector<8x128xf32>
    %cst_86 = arith.constant 1.000000e+00 : f32
    %334 = vector.broadcast %cst_86 : f32 to vector<8x128xf32>
    %335 = arith.addf %334, %333 : vector<8x128xf32>
    %336 = arith.divf %334, %335 : vector<8x128xf32>
    %337 = vector.extract_strided_slice %336 {offsets = [0, 0], sizes = [8, 32], strides = [1, 1]} : vector<8x128xf32> to vector<8x32xf32>
    %338 = vector.extract_strided_slice %336 {offsets = [0, 32], sizes = [8, 32], strides = [1, 1]} : vector<8x128xf32> to vector<8x32xf32>
    %339 = vector.extract_strided_slice %328 {offsets = [0, 64], sizes = [8, 32], strides = [1, 1]} : vector<8x128xf32> to vector<8x32xf32>
    %340 = vector.extract_strided_slice %330 {offsets = [0, 64], sizes = [8, 32], strides = [1, 1]} : vector<8x128xf32> to vector<8x32xf32>
    %341 = arith.mulf %337, %340 : vector<8x32xf32>
    %342 = arith.addf %339, %341 : vector<8x32xf32>
    %343 = math.tanh %342 : vector<8x32xf32>
    %344 = arith.subf %306, %343 : vector<8x32xf32>
    %345 = arith.mulf %338, %344 : vector<8x32xf32>
    %346 = arith.addf %343, %345 : vector<8x32xf32>
    %c56_87 = arith.constant 56 : index
    %c0_88 = arith.constant 0 : index
    %347 = vector.load %arg15[%c56_87, %c0_88] : memref<64x32xf32, #tpu.memory_space<vmem>>, vector<8x32xf32>
    tpu.vector_store %arg15[%c56_87, %c0_88], %346 {strides = array<i32>} : memref<64x32xf32, #tpu.memory_space<vmem>>, vector<8x32xf32>,
    %c0_89 = arith.constant 0 : index
    %c0_90 = arith.constant 0 : index
    %c0_91 = arith.constant 0 : index
    %348 = vector.load %arg13[%c0_89, %c0_90, %c0_91] : memref<2x8x32xf32, #tpu.memory_space<vmem>>, vector<1x8x32xf32>
    %349 = vector.shape_cast %348 : vector<1x8x32xf32> to vector<8x32xf32>
    %350 = vector.shape_cast %326 : vector<8x32xf32> to vector<1x8x32xf32>
    tpu.vector_store %arg13[%c0_89, %c0_90, %c0_91], %350 {strides = array<i32>} : memref<2x8x32xf32, #tpu.memory_space<vmem>>, vector<1x8x32xf32>,
    %c1_92 = arith.constant 1 : index
    %c0_93 = arith.constant 0 : index
    %c0_94 = arith.constant 0 : index
    %351 = vector.load %arg13[%c1_92, %c0_93, %c0_94] : memref<2x8x32xf32, #tpu.memory_space<vmem>>, vector<1x8x32xf32>
    %352 = vector.shape_cast %351 : vector<1x8x32xf32> to vector<8x32xf32>
    %353 = vector.shape_cast %346 : vector<8x32xf32> to vector<1x8x32xf32>
    tpu.vector_store %arg13[%c1_92, %c0_93, %c0_94], %353 {strides = array<i32>} : memref<2x8x32xf32, #tpu.memory_space<vmem>>, vector<1x8x32xf32>,
    %c0_95 = arith.constant 0 : index
    %c0_96 = arith.constant 0 : index
    %354 = vector.load %arg15[%c0_95, %c0_96] : memref<64x32xf32, #tpu.memory_space<vmem>>, vector<64x32xf32>
    %c0_97 = arith.constant 0 : index
    %c0_98 = arith.constant 0 : index
    %355 = vector.load %arg10[%c0_97, %c0_98] : memref<32x128xf32, #tpu.memory_space<vmem>>, vector<32x128xf32>
    %cst_99 = arith.constant dense<0.000000e+00> : vector<64x128xf32>
    %356 = tpu.matmul %354, %355, %cst_99 {dimension_numbers = #tpu.dot_dimension_numbers<[1], [0], [0], [1], [0, 0, 1, 1], [], []>} : vector<64x32xf32>, vector<32x128xf32>, vector<64x128xf32> -> vector<64x128xf32>
    %c0_100 = arith.constant 0 : index
    %c0_101 = arith.constant 0 : index
    %357 = vector.load %arg11[%c0_100, %c0_101] : memref<1x128xf32, #tpu.memory_space<vmem>>, vector<1x128xf32>
    %358 = vector.broadcast %357 : vector<1x128xf32> to vector<64x128xf32>
    %359 = arith.addf %356, %358 : vector<64x128xf32>
    %cst_102 = arith.constant dense<0xFF800000> : vector<64xf32>
    %360 = vector.multi_reduction <maximumf>, %359, %cst_102 [1] : vector<64x128xf32> to vector<64xf32>
    %361 = vector.shape_cast %360 : vector<64xf32> to vector<64x1xf32>
    %362 = vector.broadcast %361 : vector<64x1xf32> to vector<64x128xf32>
    %363 = arith.subf %359, %362 : vector<64x128xf32>
    %364 = math.exp %363 : vector<64x128xf32>
    %cst_103 = arith.constant dense<0.000000e+00> : vector<64xf32>
    %365 = vector.multi_reduction <add>, %364, %cst_103 [1] : vector<64x128xf32> to vector<64xf32>
    %366 = vector.shape_cast %365 : vector<64xf32> to vector<64x1xf32>
    %367 = math.log %366 : vector<64x1xf32>
    %368 = arith.addf %367, %361 : vector<64x1xf32>
    %369 = vector.broadcast %368 : vector<64x1xf32> to vector<64x128xf32>
    %370 = arith.subf %359, %369 : vector<64x128xf32>
    %c0_104 = arith.constant 0 : index
    %c0_105 = arith.constant 0 : index
    %371 = vector.load %arg12[%c0_104, %c0_105] : memref<64x128xf32, #tpu.memory_space<vmem>>, vector<64x128xf32>
    tpu.vector_store %arg12[%c0_104, %c0_105], %370 {strides = array<i32>} : memref<64x128xf32, #tpu.memory_space<vmem>>, vector<64x128xf32>,
    return
  }
}

</mosaic_0001>

<llo_original>
// kernel: char_predictor_rnn_forward.1
$region0: #{char_predictor_rnn_forward.1}
  #allocation0 [shape = 'u32[]', space=smem, size = 0x4, offset = 0x4, fixed_abs, tag = 'smem constant byte address 0x4 - core index']
  #allocation1 [shape = 'u32[72,128]{1,0:T(1,128)}', space=vmem, size = 0x9000, scoped, tag = 'internal scratch']
  #allocation2 [shape = 'f32[64,128]{1,0:T(8,128)}', space=vmem, size = 0x8000, scoped, tag = 'scratch operand']
  #allocation3 [shape = 'f32[64,32]{1,0:T(8,128)}', space=vmem, size = 0x8000, scoped, tag = 'scratch operand']
  %s0 = inlined_call_operand.vmem [shape: s32[64,1], index: 0, kind: input, shape index: {}]
  %s1 = inlined_call_operand.vmem [shape: f32[2,8,32], index: 1, kind: input, shape index: {}, may-alias: {1,13}]
  %s2 = inlined_call_operand.hbm [shape: f32[32,128], index: 2, kind: input, shape index: {}]
  %s3 = inlined_call_operand.hbm [shape: f32[32,128], index: 3, kind: input, shape index: {}]
  %s4 = inlined_call_operand.vmem [shape: f32[1,128], index: 4, kind: input, shape index: {}]
  %s5 = inlined_call_operand.vmem [shape: f32[1,128], index: 5, kind: input, shape index: {}]
  %s6 = inlined_call_operand.vmem [shape: f32[32,128], index: 6, kind: input, shape index: {}]
  %s7 = inlined_call_operand.vmem [shape: f32[32,128], index: 7, kind: input, shape index: {}]
  %s8 = inlined_call_operand.vmem [shape: f32[1,128], index: 8, kind: input, shape index: {}]
  %s9 = inlined_call_operand.vmem [shape: f32[1,128], index: 9, kind: input, shape index: {}]
  %s10 = inlined_call_operand.vmem [shape: f32[32,128], index: 10, kind: input, shape index: {}]
  %s11 = inlined_call_operand.vmem [shape: f32[1,128], index: 11, kind: input, shape index: {}]
  %s12 = inlined_call_operand.vmem [shape: f32[64,128], index: 12, kind: output, shape index: {0}]
  %s13 = inlined_call_operand.vmem [shape: f32[2,8,32], index: 13, kind: output, shape index: {1}, may-alias: {1,13}]
  %14 = xla_tuple %s12, %s13
  %s15 = sld [smem:[#allocation0]]
  $region74: #{char_predictor_rnn_forward.1} parent=0
    _
  %s17 = ssub.s32 1, %s15
  %s18 = scalar_select 0, %s17, %s15
  $region1: #{char_predictor_rnn_forward.1} parent=0
    #allocation4 [shape = 'u8[16384]{0}', space=vmem, size = 0x4000, scoped, tag = 'input window, operand 2, single buffered']
    #allocation5 [shape = 's32[1]{0}', space=sflag, size = 0x4, scoped, tag = 'scoped memory for char_predictor_rnn_forward.1']
    #allocation6 [shape = 'u8[16384]{0}', space=vmem, size = 0x4000, scoped, tag = 'input window, operand 3, single buffered']
    #allocation7 [shape = 's32[1]{0}', space=sflag, size = 0x4, scoped, tag = 'scoped memory for char_predictor_rnn_forward.1']
    %19 = vsyncpa [#allocation5], 0
    %20 = vsyncpa [#allocation7], 0
    // Predicated region
    $region2: #{char_predictor_rnn_forward.1} parent=1 // pred_check
      _
    $region3: #{char_predictor_rnn_forward.1} parent=1 // pred_check_branch
      %22 = sbr.rel (0) target = $region5
    $region4: #{char_predictor_rnn_forward.1} parent=1 // pred_region
      _
    $region5: #{char_predictor_rnn_forward.1} parent=1 // pred_fallthru
      _
    // Predicated region
    $region6: #{char_predictor_rnn_forward.1} parent=1 // pred_check
      _
    $region7: #{char_predictor_rnn_forward.1} parent=1 // pred_check_branch
      %24 = sbr.rel (0) target = $region9
    $region8: #{char_predictor_rnn_forward.1} parent=1 // pred_region
      _
    $region9: #{char_predictor_rnn_forward.1} parent=1 // pred_fallthru
      _
    // Predicated region
    $region10: #{char_predictor_rnn_forward.1} parent=1 // pred_check
      _
    $region11: #{char_predictor_rnn_forward.1} parent=1 // pred_check_branch
      %26 = sbr.rel (0) target = $region13
    $region12: #{char_predictor_rnn_forward.1} parent=1 // pred_region
      %28 = vsyncadd [#allocation5], 0
      %s29 = sshll.u32 %s2, 4
      %s30 = int_to_ptr.hbm [resolvable:$true] %s29
      %s31 = sshll.u32 [#allocation4], 4
      %s32 = int_to_ptr.vmem [resolvable:$true] %s31
      %37 = dma.hbm_to_vmem [thread:$0]  %s30, 512, %s32, [#allocation5], 128, 128, 8
    $region13: #{char_predictor_rnn_forward.1} parent=1 // pred_fallthru
      _
    // Predicated region
    $region14: #{char_predictor_rnn_forward.1} parent=1 // pred_check
      _
    $region15: #{char_predictor_rnn_forward.1} parent=1 // pred_check_branch
      %39 = sbr.rel (0) target = $region17
    $region16: #{char_predictor_rnn_forward.1} parent=1 // pred_region
      %41 = vsyncadd [#allocation7], 0
      %s42 = sshll.u32 %s3, 4
      %s43 = int_to_ptr.hbm [resolvable:$true] %s42
      %s44 = sshll.u32 [#allocation6], 4
      %s45 = int_to_ptr.vmem [resolvable:$true] %s44
      %50 = dma.hbm_to_vmem [thread:$0]  %s43, 512, %s45, [#allocation7], 128, 128, 8
    $region17: #{char_predictor_rnn_forward.1} parent=1 // pred_fallthru
      _
    // Predicated region
    $region18: #{char_predictor_rnn_forward.1} parent=1 // pred_check
      _
    $region19: #{char_predictor_rnn_forward.1} parent=1 // pred_check_branch
      %52 = sbr.rel (0) target = $region21
    $region20: #{char_predictor_rnn_forward.1} parent=1 // pred_region
      _
    $region21: #{char_predictor_rnn_forward.1} parent=1 // pred_fallthru
      _
    // Predicated region
    $region22: #{char_predictor_rnn_forward.1} parent=1 // pred_check
      _
    $region23: #{char_predictor_rnn_forward.1} parent=1 // pred_check_branch
      %54 = sbr.rel (0) target = $region25
    $region24: #{char_predictor_rnn_forward.1} parent=1 // pred_region
      _
    $region25: #{char_predictor_rnn_forward.1} parent=1 // pred_fallthru
      _
    // Predicated region
    $region26: #{char_predictor_rnn_forward.1} parent=1 // pred_check
      _
    $region27: #{char_predictor_rnn_forward.1} parent=1 // pred_check_branch
      %56 = sbr.rel (0) target = $region29
    $region28: #{char_predictor_rnn_forward.1} parent=1 // pred_region
      _
    $region29: #{char_predictor_rnn_forward.1} parent=1 // pred_fallthru
      _
    // Predicated region
    $region30: #{char_predictor_rnn_forward.1} parent=1 // pred_check
      _
    $region31: #{char_predictor_rnn_forward.1} parent=1 // pred_check_branch
      %58 = sbr.rel (0) target = $region33
    $region32: #{char_predictor_rnn_forward.1} parent=1 // pred_region
      _
    $region33: #{char_predictor_rnn_forward.1} parent=1 // pred_fallthru
      _
    // Predicated region
    $region34: #{char_predictor_rnn_forward.1} parent=1 // pred_check
      _
    $region35: #{char_predictor_rnn_forward.1} parent=1 // pred_check_branch
      %60 = sbr.rel (0) target = $region37
    $region36: #{char_predictor_rnn_forward.1} parent=1 // pred_region
      _
    $region37: #{char_predictor_rnn_forward.1} parent=1 // pred_fallthru
      _
    // Predicated region
    $region38: #{char_predictor_rnn_forward.1} parent=1 // pred_check
      _
    $region39: #{char_predictor_rnn_forward.1} parent=1 // pred_check_branch
      %62 = sbr.rel (0) target = $region41
    $region40: #{char_predictor_rnn_forward.1} parent=1 // pred_region
      _
    $region41: #{char_predictor_rnn_forward.1} parent=1 // pred_fallthru
      _
    // Predicated region
    $region42: #{char_predictor_rnn_forward.1} parent=1 // pred_check
      _
    $region43: #{char_predictor_rnn_forward.1} parent=1 // pred_check_branch
      %64 = sbr.rel (0) target = $region45
    $region44: #{char_predictor_rnn_forward.1} parent=1 // pred_region
      _
    $region45: #{char_predictor_rnn_forward.1} parent=1 // pred_fallthru
      _
    // Predicated region
    $region46: #{char_predictor_rnn_forward.1} parent=1 // pred_check
      _
    $region47: #{char_predictor_rnn_forward.1} parent=1 // pred_check_branch
      %66 = sbr.rel (0) target = $region49
    $region48: #{char_predictor_rnn_forward.1} parent=1 // pred_region
      _
    $region49: #{char_predictor_rnn_forward.1} parent=1 // pred_fallthru
      _
    // Predicated region
    $region50: #{char_predictor_rnn_forward.1} parent=1 // pred_check
      _
    $region51: #{char_predictor_rnn_forward.1} parent=1 // pred_check_branch
      %68 = sbr.rel (0) target = $region53
    $region52: #{char_predictor_rnn_forward.1} parent=1 // pred_region
      %70 = dma.done [#allocation5], 512
    $region53: #{char_predictor_rnn_forward.1} parent=1 // pred_fallthru
      _
    // Predicated region
    $region54: #{char_predictor_rnn_forward.1} parent=1 // pred_check
      _
    $region55: #{char_predictor_rnn_forward.1} parent=1 // pred_check_branch
      %72 = sbr.rel (0) target = $region57
    $region56: #{char_predictor_rnn_forward.1} parent=1 // pred_region
      %74 = dma.done [#allocation7], 512
    $region57: #{char_predictor_rnn_forward.1} parent=1 // pred_fallthru
      _
    %v75 = vld [vmem:[%s0] sm:$0xff]
    %v76 = vld [vmem:[%s0 + $0x8] sm:$0xff]
    %v77 = vld [vmem:[%s0 + $0x10] sm:$0xff]
    %v78 = vld [vmem:[%s0 + $0x18] sm:$0xff]
    %v79 = vld [vmem:[%s0 + $0x20] sm:$0xff]
    %v80 = vld [vmem:[%s0 + $0x28] sm:$0xff]
    %v81 = vld [vmem:[%s0 + $0x30] sm:$0xff]
    %v82 = vld [vmem:[%s0 + $0x38] sm:$0xff]
    %v83 = vlaneseq
    %v84 = vand.u32 %v83, 127
    %85 = vset.pattern.permute.xlu0 0
    %86 = vperm.xlu0 %85, %v75
    %v87 = vpop.permute.xlu0 %86
    %88 = vset.pattern.permute.xlu0 0
    %89 = vperm.xlu0 %88, %v76
    %v90 = vpop.permute.xlu0 %89
    %91 = vset.pattern.permute.xlu0 0
    %92 = vperm.xlu0 %91, %v77
    %v93 = vpop.permute.xlu0 %92
    %94 = vset.pattern.permute.xlu0 0
    %95 = vperm.xlu0 %94, %v78
    %v96 = vpop.permute.xlu0 %95
    %97 = vset.pattern.permute.xlu0 0
    %98 = vperm.xlu0 %97, %v79
    %v99 = vpop.permute.xlu0 %98
    %100 = vset.pattern.permute.xlu0 0
    %101 = vperm.xlu0 %100, %v80
    %v102 = vpop.permute.xlu0 %101
    %103 = vset.pattern.permute.xlu0 0
    %104 = vperm.xlu0 %103, %v81
    %v105 = vpop.permute.xlu0 %104
    %106 = vset.pattern.permute.xlu0 0
    %107 = vperm.xlu0 %106, %v82
    %v108 = vpop.permute.xlu0 %107
    %vm109 = vcmp.eq.s32.totalorder %v84, %v87
    %vm110 = vcmp.eq.s32.totalorder %v84, %v90
    %vm111 = vcmp.eq.s32.totalorder %v84, %v93
    %vm112 = vcmp.eq.s32.totalorder %v84, %v96
    %vm113 = vcmp.eq.s32.totalorder %v84, %v99
    %vm114 = vcmp.eq.s32.totalorder %v84, %v102
    %vm115 = vcmp.eq.s32.totalorder %v84, %v105
    %vm116 = vcmp.eq.s32.totalorder %v84, %v108
    %v117 = vsel %vm109, 1, 0
    %v118 = vsel %vm110, 1, 0
    %v119 = vsel %vm111, 1, 0
    %v120 = vsel %vm112, 1, 0
    %v121 = vsel %vm113, 1, 0
    %v122 = vsel %vm114, 1, 0
    %v123 = vsel %vm115, 1, 0
    %v124 = vsel %vm116, 1, 0
    %v125 = vcvt.s32.f32 %v117
    %v126 = vcvt.s32.f32 %v118
    %v127 = vcvt.s32.f32 %v119
    %v128 = vcvt.s32.f32 %v120
    %v129 = vcvt.s32.f32 %v121
    %v130 = vcvt.s32.f32 %v122
    %v131 = vcvt.s32.f32 %v123
    %v132 = vcvt.s32.f32 %v124
    %v133 = vld [vmem:[#allocation4] sm:$0xff]
    %v134 = vld [vmem:[#allocation4 + $0x8] sm:$0xff]
    %v135 = vld [vmem:[#allocation4 + $0x10] sm:$0xff]
    %v136 = vld [vmem:[#allocation4 + $0x18] sm:$0xff]
    %v137 = vld [vmem:[%s4] sm:$0x1]
    %v139 = vperm.slane %v137, 0
    %vm141 = vcmask 261120
    %v143 = vsel %vm141, %v125, 0
    %v146 = vsel %vm141, %v126, 0
    %v149 = vsel %vm141, %v127, 0
    %v152 = vsel %vm141, %v128, 0
    %v155 = vsel %vm141, %v129, 0
    %v158 = vsel %vm141, %v130, 0
    %v161 = vsel %vm141, %v131, 0
    %v164 = vsel %vm141, %v132, 0
    %166 = vmatpush.msra.mxu0 0.0
    %167 = vmatpush.msra.mxu0 0.0
    %168 = vmatpush.msra.mxu0 0.0
    %169 = vmatpush.msra.mxu0 0.0
    %170 = vmatpush.msra.mxu0 0.0
    %171 = vmatpush.msra.mxu0 0.0
    %172 = vmatpush.msra.mxu0 0.0
    %173 = vmatpush.msra.mxu0 0.0
    %174 = vmatpush.msra.mxu0 0.0
    %175 = vmatpush.msra.mxu0 0.0
    %176 = vmatpush.msra.mxu0 0.0
    %177 = vmatpush.msra.mxu0 0.0
    %178 = vmatpush.msra.mxu0 %v136
    %179 = vmatpush.msra.mxu0 %v135
    %180 = vmatpush.msra.mxu0 %v134
    %181 = vmatpush.msra.mxu0 %v133
    %182 = vmatmul.f32.gmra.mxu0 %v143
    %v183 = vpop.f32.mrf.mxu0
    %v184 = vadd.f32 %v139, %v183
    %185 = vmatmul.f32.gmra.mxu0 %v146
    %v186 = vpop.f32.mrf.mxu0
    %v187 = vadd.f32 %v139, %v186
    %188 = vmatmul.f32.gmra.mxu0 %v149
    %v189 = vpop.f32.mrf.mxu0
    %v190 = vadd.f32 %v139, %v189
    %191 = vmatmul.f32.gmra.mxu0 %v152
    %v192 = vpop.f32.mrf.mxu0
    %v193 = vadd.f32 %v139, %v192
    %194 = vmatmul.f32.gmra.mxu0 %v155
    %v195 = vpop.f32.mrf.mxu0
    %v196 = vadd.f32 %v139, %v195
    %197 = vmatmul.f32.gmra.mxu0 %v158
    %v198 = vpop.f32.mrf.mxu0
    %v199 = vadd.f32 %v139, %v198
    %200 = vmatmul.f32.gmra.mxu0 %v161
    %v201 = vpop.f32.mrf.mxu0
    %v202 = vadd.f32 %v139, %v201
    %203 = vmatmul.f32.gmra.mxu0 %v164
    %v204 = vpop.f32.mrf.mxu0
    %v205 = vadd.f32 %v139, %v204
    %206 = vdwg.mxu0
    %207 = vst [vmem:[#allocation2] sm:$0xff] %v184
    %208 = vst [vmem:[#allocation2 + $0x8] sm:$0xff] %v187
    %209 = vst [vmem:[#allocation2 + $0x10] sm:$0xff] %v190
    %210 = vst [vmem:[#allocation2 + $0x18] sm:$0xff] %v193
    %211 = vst [vmem:[#allocation2 + $0x20] sm:$0xff] %v196
    %212 = vst [vmem:[#allocation2 + $0x28] sm:$0xff] %v199
    %213 = vst [vmem:[#allocation2 + $0x30] sm:$0xff] %v202
    %214 = vst [vmem:[#allocation2 + $0x38] sm:$0xff] %v205
    %v215 = vld [vmem:[#allocation6] sm:$0xff]
    %v216 = vld [vmem:[#allocation6 + $0x8] sm:$0xff]
    %v217 = vld [vmem:[#allocation6 + $0x10] sm:$0xff]
    %v218 = vld [vmem:[#allocation6 + $0x18] sm:$0xff]
    %v219 = vld [vmem:[%s7] sm:$0xff]
    %v220 = vld [vmem:[%s7 + $0x8] sm:$0xff]
    %v221 = vld [vmem:[%s7 + $0x10] sm:$0xff]
    %v222 = vld [vmem:[%s7 + $0x18] sm:$0xff]
    %v223 = vld [vmem:[%s5] sm:$0x1]
    %v225 = vperm.slane %v223, 0
    %v227 = vld [vmem:[%s9] sm:$0x1]
    %v229 = vperm.slane %v227, 0
    %v231 = vld [vmem:[%s6] sm:$0xff]
    %v232 = vld [vmem:[%s6 + $0x8] sm:$0xff]
    %v233 = vld [vmem:[%s6 + $0x10] sm:$0xff]
    %v234 = vld [vmem:[%s6 + $0x18] sm:$0xff]
    %v235 = vld [vmem:[%s8] sm:$0x1]
    %v237 = vperm.slane %v235, 0
    %v239 = vld [vmem:[%s1] sm:$0xff]
    %s240 = scalar_lea.vmem %s1, 8
    %v241 = vld [vmem:[%s240] sm:$0xff]
    %v242 = vld [vmem:[#allocation2] sm:$0xff]
    %v244 = vsel %vm141, %v239, 0
    %246 = vmatpush.msra.mxu0 0.0
    %247 = vmatpush.msra.mxu0 0.0
    %248 = vmatpush.msra.mxu0 0.0
    %249 = vmatpush.msra.mxu0 0.0
    %250 = vmatpush.msra.mxu0 0.0
    %251 = vmatpush.msra.mxu0 0.0
    %252 = vmatpush.msra.mxu0 0.0
    %253 = vmatpush.msra.mxu0 0.0
    %254 = vmatpush.msra.mxu0 0.0
    %255 = vmatpush.msra.mxu0 0.0
    %256 = vmatpush.msra.mxu0 0.0
    %257 = vmatpush.msra.mxu0 0.0
    %258 = vmatpush.msra.mxu0 %v218
    %259 = vmatpush.msra.mxu0 %v217
    %260 = vmatpush.msra.mxu0 %v216
    %261 = vmatpush.msra.mxu0 %v215
    %262 = vmatmul.f32.gmra.mxu0 %v244
    %v263 = vpop.f32.mrf.mxu0
    %v264 = vadd.f32 %v225, %v263
    %265 = vdwg.mxu0
    %v266 = vadd.f32 %v242, %v264
    %v267 = vxor.u32 %v266, 2147483648
    %v268 = vmul.f32 %v267, 1.442695
    %v269 = vpow.pop %v268
    %v270 = vadd.f32 %v269, 1.0
    %v271 = vrcp.pop %v270
    %v272 = vmul.f32 %v270, %v271
    %v273 = vsub.f32 1.0, %v272
    %v274 = vmul.f32 %v271, %v273
    %v275 = vadd.f32 %v271, %v274
    %vm276 = vweird.f32 %v270
    %vm277 = vweird.f32 %v271
    %vm278 = vmor %vm276, %vm277
    %v279 = vsel %vm278, %v271, %v275
    %v280 = vand.u32 2147483647, %v270
    %vm281 = vcmp.eq.f32.partialorder %v280, 8.507059e+37
    %v282 = vand.u32 %v270, 2147483648
    %v283 = vor.u32 1.1754944e-38, %v282
    %v284 = vsel %vm281, %v283, %v279
    %v285 = vmul.f32 1.0, %v284
    %287 = vrot.lane.b32.xlu0 %v264, 64
    %v288 = vpop.permute.xlu0 %287
    %v290 = vmul.f32 %v285, %v288
    %292 = vrot.lane.b32.xlu0 %v290, 64
    %v293 = vpop.permute.xlu0 %292
    %v295 = vadd.f32 %v242, %v293
    %v296 = vtanh.pop %v295
    %298 = vrot.lane.b32.xlu0 %v296, 64
    %v299 = vpop.permute.xlu0 %298
    %v301 = vsub.f32 %v239, %v299
    %303 = vrot.lane.b32.xlu0 %v301, 32
    %v304 = vpop.permute.xlu0 %303
    %v306 = vmul.f32 %v285, %v304
    %308 = vrot.lane.b32.xlu0 %v306, 32
    %v309 = vpop.permute.xlu0 %308
    %v311 = vadd.f32 %v296, %v309
    %313 = vrot.lane.b32.xlu0 %v311, 64
    %v314 = vpop.permute.xlu0 %313
    %v315 = vsel %vm141, %v314, 0
    %317 = vmatpush.msra.mxu0 0.0
    %318 = vmatpush.msra.mxu0 0.0
    %319 = vmatpush.msra.mxu0 0.0
    %320 = vmatpush.msra.mxu0 0.0
    %321 = vmatpush.msra.mxu0 0.0
    %322 = vmatpush.msra.mxu0 0.0
    %323 = vmatpush.msra.mxu0 0.0
    %324 = vmatpush.msra.mxu0 0.0
    %325 = vmatpush.msra.mxu0 0.0
    %326 = vmatpush.msra.mxu0 0.0
    %327 = vmatpush.msra.mxu0 0.0
    %328 = vmatpush.msra.mxu0 0.0
    %329 = vmatpush.msra.mxu0 %v234
    %330 = vmatpush.msra.mxu0 %v233
    %331 = vmatpush.msra.mxu0 %v232
    %332 = vmatpush.msra.mxu0 %v231
    %333 = vmatmul.f32.gmra.mxu0 %v315
    %v334 = vpop.f32.mrf.mxu0
    %v335 = vadd.f32 %v237, %v334
    %336 = vdwg.mxu0
    %v338 = vsel %vm141, %v241, 0
    %340 = vmatpush.msra.mxu0 0.0
    %341 = vmatpush.msra.mxu0 0.0
    %342 = vmatpush.msra.mxu0 0.0
    %343 = vmatpush.msra.mxu0 0.0
    %344 = vmatpush.msra.mxu0 0.0
    %345 = vmatpush.msra.mxu0 0.0
    %346 = vmatpush.msra.mxu0 0.0
    %347 = vmatpush.msra.mxu0 0.0
    %348 = vmatpush.msra.mxu0 0.0
    %349 = vmatpush.msra.mxu0 0.0
    %350 = vmatpush.msra.mxu0 0.0
    %351 = vmatpush.msra.mxu0 0.0
    %352 = vmatpush.msra.mxu0 %v222
    %353 = vmatpush.msra.mxu0 %v221
    %354 = vmatpush.msra.mxu0 %v220
    %355 = vmatpush.msra.mxu0 %v219
    %356 = vmatmul.f32.gmra.mxu0 %v338
    %v357 = vpop.f32.mrf.mxu0
    %v358 = vadd.f32 %v229, %v357
    %359 = vdwg.mxu0
    %v360 = vadd.f32 %v335, %v358
    %v361 = vxor.u32 %v360, 2147483648
    %v362 = vmul.f32 %v361, 1.442695
    %v363 = vpow.pop %v362
    %v364 = vadd.f32 %v363, 1.0
    %v365 = vrcp.pop %v364
    %v366 = vmul.f32 %v364, %v365
    %v367 = vsub.f32 1.0, %v366
    %v368 = vmul.f32 %v365, %v367
    %v369 = vadd.f32 %v365, %v368
    %vm370 = vweird.f32 %v364
    %vm371 = vweird.f32 %v365
    %vm372 = vmor %vm370, %vm371
    %v373 = vsel %vm372, %v365, %v369
    %v374 = vand.u32 2147483647, %v364
    %vm375 = vcmp.eq.f32.partialorder %v374, 8.507059e+37
    %v376 = vand.u32 %v364, 2147483648
    %v377 = vor.u32 1.1754944e-38, %v376
    %v378 = vsel %vm375, %v377, %v373
    %v379 = vmul.f32 1.0, %v378
    %381 = vrot.lane.b32.xlu0 %v358, 64
    %v382 = vpop.permute.xlu0 %381
    %v384 = vmul.f32 %v379, %v382
    %386 = vrot.lane.b32.xlu0 %v384, 64
    %v387 = vpop.permute.xlu0 %386
    %v389 = vadd.f32 %v335, %v387
    %v390 = vtanh.pop %v389
    %392 = vrot.lane.b32.xlu0 %v390, 64
    %v393 = vpop.permute.xlu0 %392
    %v395 = vsub.f32 %v241, %v393
    %397 = vrot.lane.b32.xlu0 %v395, 32
    %v398 = vpop.permute.xlu0 %397
    %v400 = vmul.f32 %v379, %v398
    %402 = vrot.lane.b32.xlu0 %v400, 32
    %v403 = vpop.permute.xlu0 %402
    %v405 = vadd.f32 %v390, %v403
    %407 = vrot.lane.b32.xlu0 %v405, 64
    %v408 = vpop.permute.xlu0 %407
    %410 = vst.msk [vmem:[#allocation3] sm:$0xff] %vm141, %v408
    %v411 = vld [vmem:[#allocation2 + $0x8] sm:$0xff]
    %412 = vmatpush.msra.mxu0 0.0
    %413 = vmatpush.msra.mxu0 0.0
    %414 = vmatpush.msra.mxu0 0.0
    %415 = vmatpush.msra.mxu0 0.0
    %416 = vmatpush.msra.mxu0 0.0
    %417 = vmatpush.msra.mxu0 0.0
    %418 = vmatpush.msra.mxu0 0.0
    %419 = vmatpush.msra.mxu0 0.0
    %420 = vmatpush.msra.mxu0 0.0
    %421 = vmatpush.msra.mxu0 0.0
    %422 = vmatpush.msra.mxu0 0.0
    %423 = vmatpush.msra.mxu0 0.0
    %424 = vmatpush.msra.mxu0 %v218
    %425 = vmatpush.msra.mxu0 %v217
    %426 = vmatpush.msra.mxu0 %v216
    %427 = vmatpush.msra.mxu0 %v215
    %428 = vmatmul.f32.gmra.mxu0 %v315
    %v429 = vpop.f32.mrf.mxu0
    %v430 = vadd.f32 %v225, %v429
    %431 = vdwg.mxu0
    %v432 = vadd.f32 %v411, %v430
    %v433 = vxor.u32 %v432, 2147483648
    %v434 = vmul.f32 %v433, 1.442695
    %v435 = vpow.pop %v434
    %v436 = vadd.f32 %v435, 1.0
    %v437 = vrcp.pop %v436
    %v438 = vmul.f32 %v436, %v437
    %v439 = vsub.f32 1.0, %v438
    %v440 = vmul.f32 %v437, %v439
    %v441 = vadd.f32 %v437, %v440
    %vm442 = vweird.f32 %v436
    %vm443 = vweird.f32 %v437
    %vm444 = vmor %vm442, %vm443
    %v445 = vsel %vm444, %v437, %v441
    %v446 = vand.u32 2147483647, %v436
    %vm447 = vcmp.eq.f32.partialorder %v446, 8.507059e+37
    %v448 = vand.u32 %v436, 2147483648
    %v449 = vor.u32 1.1754944e-38, %v448
    %v450 = vsel %vm447, %v449, %v445
    %v451 = vmul.f32 1.0, %v450
    %453 = vrot.lane.b32.xlu0 %v430, 64
    %v454 = vpop.permute.xlu0 %453
    %v456 = vmul.f32 %v451, %v454
    %458 = vrot.lane.b32.xlu0 %v456, 64
    %v459 = vpop.permute.xlu0 %458
    %v461 = vadd.f32 %v411, %v459
    %v462 = vtanh.pop %v461
    %v463 = vsub.f32 %v311, %v462
    %465 = vrot.lane.b32.xlu0 %v463, 96
    %v466 = vpop.permute.xlu0 %465
    %v468 = vmul.f32 %v451, %v466
    %470 = vrot.lane.b32.xlu0 %v468, 32
    %v471 = vpop.permute.xlu0 %470
    %v473 = vadd.f32 %v462, %v471
    %475 = vrot.lane.b32.xlu0 %v473, 64
    %v476 = vpop.permute.xlu0 %475
    %v477 = vsel %vm141, %v476, 0
    %479 = vmatpush.msra.mxu0 0.0
    %480 = vmatpush.msra.mxu0 0.0
    %481 = vmatpush.msra.mxu0 0.0
    %482 = vmatpush.msra.mxu0 0.0
    %483 = vmatpush.msra.mxu0 0.0
    %484 = vmatpush.msra.mxu0 0.0
    %485 = vmatpush.msra.mxu0 0.0
    %486 = vmatpush.msra.mxu0 0.0
    %487 = vmatpush.msra.mxu0 0.0
    %488 = vmatpush.msra.mxu0 0.0
    %489 = vmatpush.msra.mxu0 0.0
    %490 = vmatpush.msra.mxu0 0.0
    %491 = vmatpush.msra.mxu0 %v234
    %492 = vmatpush.msra.mxu0 %v233
    %493 = vmatpush.msra.mxu0 %v232
    %494 = vmatpush.msra.mxu0 %v231
    %495 = vmatmul.f32.gmra.mxu0 %v477
    %v496 = vpop.f32.mrf.mxu0
    %v497 = vadd.f32 %v237, %v496
    %498 = vdwg.mxu0
    %v499 = vsel %vm141, %v408, 0
    %501 = vmatpush.msra.mxu0 0.0
    %502 = vmatpush.msra.mxu0 0.0
    %503 = vmatpush.msra.mxu0 0.0
    %504 = vmatpush.msra.mxu0 0.0
    %505 = vmatpush.msra.mxu0 0.0
    %506 = vmatpush.msra.mxu0 0.0
    %507 = vmatpush.msra.mxu0 0.0
    %508 = vmatpush.msra.mxu0 0.0
    %509 = vmatpush.msra.mxu0 0.0
    %510 = vmatpush.msra.mxu0 0.0
    %511 = vmatpush.msra.mxu0 0.0
    %512 = vmatpush.msra.mxu0 0.0
    %513 = vmatpush.msra.mxu0 %v222
    %514 = vmatpush.msra.mxu0 %v221
    %515 = vmatpush.msra.mxu0 %v220
    %516 = vmatpush.msra.mxu0 %v219
    %517 = vmatmul.f32.gmra.mxu0 %v499
    %v518 = vpop.f32.mrf.mxu0
    %v519 = vadd.f32 %v229, %v518
    %520 = vdwg.mxu0
    %v521 = vadd.f32 %v497, %v519
    %v522 = vxor.u32 %v521, 2147483648
    %v523 = vmul.f32 %v522, 1.442695
    %v524 = vpow.pop %v523
    %v525 = vadd.f32 %v524, 1.0
    %v526 = vrcp.pop %v525
    %v527 = vmul.f32 %v525, %v526
    %v528 = vsub.f32 1.0, %v527
    %v529 = vmul.f32 %v526, %v528
    %v530 = vadd.f32 %v526, %v529
    %vm531 = vweird.f32 %v525
    %vm532 = vweird.f32 %v526
    %vm533 = vmor %vm531, %vm532
    %v534 = vsel %vm533, %v526, %v530
    %v535 = vand.u32 2147483647, %v525
    %vm536 = vcmp.eq.f32.partialorder %v535, 8.507059e+37
    %v537 = vand.u32 %v525, 2147483648
    %v538 = vor.u32 1.1754944e-38, %v537
    %v539 = vsel %vm536, %v538, %v534
    %v540 = vmul.f32 1.0, %v539
    %542 = vrot.lane.b32.xlu0 %v519, 64
    %v543 = vpop.permute.xlu0 %542
    %v545 = vmul.f32 %v540, %v543
    %547 = vrot.lane.b32.xlu0 %v545, 64
    %v548 = vpop.permute.xlu0 %547
    %v550 = vadd.f32 %v497, %v548
    %v551 = vtanh.pop %v550
    %v552 = vsub.f32 %v405, %v551
    %554 = vrot.lane.b32.xlu0 %v552, 96
    %v555 = vpop.permute.xlu0 %554
    %v557 = vmul.f32 %v540, %v555
    %559 = vrot.lane.b32.xlu0 %v557, 32
    %v560 = vpop.permute.xlu0 %559
    %v562 = vadd.f32 %v551, %v560
    %564 = vrot.lane.b32.xlu0 %v562, 64
    %v565 = vpop.permute.xlu0 %564
    %567 = vst.msk [vmem:[#allocation3 + $0x8] sm:$0xff] %vm141, %v565
    %v568 = vld [vmem:[#allocation2 + $0x10] sm:$0xff]
    %569 = vmatpush.msra.mxu0 0.0
    %570 = vmatpush.msra.mxu0 0.0
    %571 = vmatpush.msra.mxu0 0.0
    %572 = vmatpush.msra.mxu0 0.0
    %573 = vmatpush.msra.mxu0 0.0
    %574 = vmatpush.msra.mxu0 0.0
    %575 = vmatpush.msra.mxu0 0.0
    %576 = vmatpush.msra.mxu0 0.0
    %577 = vmatpush.msra.mxu0 0.0
    %578 = vmatpush.msra.mxu0 0.0
    %579 = vmatpush.msra.mxu0 0.0
    %580 = vmatpush.msra.mxu0 0.0
    %581 = vmatpush.msra.mxu0 %v218
    %582 = vmatpush.msra.mxu0 %v217
    %583 = vmatpush.msra.mxu0 %v216
    %584 = vmatpush.msra.mxu0 %v215
    %585 = vmatmul.f32.gmra.mxu0 %v477
    %v586 = vpop.f32.mrf.mxu0
    %v587 = vadd.f32 %v225, %v586
    %588 = vdwg.mxu0
    %v589 = vadd.f32 %v568, %v587
    %v590 = vxor.u32 %v589, 2147483648
    %v591 = vmul.f32 %v590, 1.442695
    %v592 = vpow.pop %v591
    %v593 = vadd.f32 %v592, 1.0
    %v594 = vrcp.pop %v593
    %v595 = vmul.f32 %v593, %v594
    %v596 = vsub.f32 1.0, %v595
    %v597 = vmul.f32 %v594, %v596
    %v598 = vadd.f32 %v594, %v597
    %vm599 = vweird.f32 %v593
    %vm600 = vweird.f32 %v594
    %vm601 = vmor %vm599, %vm600
    %v602 = vsel %vm601, %v594, %v598
    %v603 = vand.u32 2147483647, %v593
    %vm604 = vcmp.eq.f32.partialorder %v603, 8.507059e+37
    %v605 = vand.u32 %v593, 2147483648
    %v606 = vor.u32 1.1754944e-38, %v605
    %v607 = vsel %vm604, %v606, %v602
    %v608 = vmul.f32 1.0, %v607
    %610 = vrot.lane.b32.xlu0 %v587, 64
    %v611 = vpop.permute.xlu0 %610
    %v613 = vmul.f32 %v608, %v611
    %615 = vrot.lane.b32.xlu0 %v613, 64
    %v616 = vpop.permute.xlu0 %615
    %v618 = vadd.f32 %v568, %v616
    %v619 = vtanh.pop %v618
    %v620 = vsub.f32 %v473, %v619
    %622 = vrot.lane.b32.xlu0 %v620, 96
    %v623 = vpop.permute.xlu0 %622
    %v625 = vmul.f32 %v608, %v623
    %627 = vrot.lane.b32.xlu0 %v625, 32
    %v628 = vpop.permute.xlu0 %627
    %v630 = vadd.f32 %v619, %v628
    %632 = vrot.lane.b32.xlu0 %v630, 64
    %v633 = vpop.permute.xlu0 %632
    %v634 = vsel %vm141, %v633, 0
    %636 = vmatpush.msra.mxu0 0.0
    %637 = vmatpush.msra.mxu0 0.0
    %638 = vmatpush.msra.mxu0 0.0
    %639 = vmatpush.msra.mxu0 0.0
    %640 = vmatpush.msra.mxu0 0.0
    %641 = vmatpush.msra.mxu0 0.0
    %642 = vmatpush.msra.mxu0 0.0
    %643 = vmatpush.msra.mxu0 0.0
    %644 = vmatpush.msra.mxu0 0.0
    %645 = vmatpush.msra.mxu0 0.0
    %646 = vmatpush.msra.mxu0 0.0
    %647 = vmatpush.msra.mxu0 0.0
    %648 = vmatpush.msra.mxu0 %v234
    %649 = vmatpush.msra.mxu0 %v233
    %650 = vmatpush.msra.mxu0 %v232
    %651 = vmatpush.msra.mxu0 %v231
    %652 = vmatmul.f32.gmra.mxu0 %v634
    %v653 = vpop.f32.mrf.mxu0
    %v654 = vadd.f32 %v237, %v653
    %655 = vdwg.mxu0
    %v656 = vsel %vm141, %v565, 0
    %658 = vmatpush.msra.mxu0 0.0
    %659 = vmatpush.msra.mxu0 0.0
    %660 = vmatpush.msra.mxu0 0.0
    %661 = vmatpush.msra.mxu0 0.0
    %662 = vmatpush.msra.mxu0 0.0
    %663 = vmatpush.msra.mxu0 0.0
    %664 = vmatpush.msra.mxu0 0.0
    %665 = vmatpush.msra.mxu0 0.0
    %666 = vmatpush.msra.mxu0 0.0
    %667 = vmatpush.msra.mxu0 0.0
    %668 = vmatpush.msra.mxu0 0.0
    %669 = vmatpush.msra.mxu0 0.0
    %670 = vmatpush.msra.mxu0 %v222
    %671 = vmatpush.msra.mxu0 %v221
    %672 = vmatpush.msra.mxu0 %v220
    %673 = vmatpush.msra.mxu0 %v219
    %674 = vmatmul.f32.gmra.mxu0 %v656
    %v675 = vpop.f32.mrf.mxu0
    %v676 = vadd.f32 %v229, %v675
    %677 = vdwg.mxu0
    %v678 = vadd.f32 %v654, %v676
    %v679 = vxor.u32 %v678, 2147483648
    %v680 = vmul.f32 %v679, 1.442695
    %v681 = vpow.pop %v680
    %v682 = vadd.f32 %v681, 1.0
    %v683 = vrcp.pop %v682
    %v684 = vmul.f32 %v682, %v683
    %v685 = vsub.f32 1.0, %v684
    %v686 = vmul.f32 %v683, %v685
    %v687 = vadd.f32 %v683, %v686
    %vm688 = vweird.f32 %v682
    %vm689 = vweird.f32 %v683
    %vm690 = vmor %vm688, %vm689
    %v691 = vsel %vm690, %v683, %v687
    %v692 = vand.u32 2147483647, %v682
    %vm693 = vcmp.eq.f32.partialorder %v692, 8.507059e+37
    %v694 = vand.u32 %v682, 2147483648
    %v695 = vor.u32 1.1754944e-38, %v694
    %v696 = vsel %vm693, %v695, %v691
    %v697 = vmul.f32 1.0, %v696
    %699 = vrot.lane.b32.xlu0 %v676, 64
    %v700 = vpop.permute.xlu0 %699
    %v702 = vmul.f32 %v697, %v700
    %704 = vrot.lane.b32.xlu0 %v702, 64
    %v705 = vpop.permute.xlu0 %704
    %v707 = vadd.f32 %v654, %v705
    %v708 = vtanh.pop %v707
    %v709 = vsub.f32 %v562, %v708
    %711 = vrot.lane.b32.xlu0 %v709, 96
    %v712 = vpop.permute.xlu0 %711
    %v714 = vmul.f32 %v697, %v712
    %716 = vrot.lane.b32.xlu0 %v714, 32
    %v717 = vpop.permute.xlu0 %716
    %v719 = vadd.f32 %v708, %v717
    %721 = vrot.lane.b32.xlu0 %v719, 64
    %v722 = vpop.permute.xlu0 %721
    %724 = vst.msk [vmem:[#allocation3 + $0x10] sm:$0xff] %vm141, %v722
    %v725 = vld [vmem:[#allocation2 + $0x18] sm:$0xff]
    %726 = vmatpush.msra.mxu0 0.0
    %727 = vmatpush.msra.mxu0 0.0
    %728 = vmatpush.msra.mxu0 0.0
    %729 = vmatpush.msra.mxu0 0.0
    %730 = vmatpush.msra.mxu0 0.0
    %731 = vmatpush.msra.mxu0 0.0
    %732 = vmatpush.msra.mxu0 0.0
    %733 = vmatpush.msra.mxu0 0.0
    %734 = vmatpush.msra.mxu0 0.0
    %735 = vmatpush.msra.mxu0 0.0
    %736 = vmatpush.msra.mxu0 0.0
    %737 = vmatpush.msra.mxu0 0.0
    %738 = vmatpush.msra.mxu0 %v218
    %739 = vmatpush.msra.mxu0 %v217
    %740 = vmatpush.msra.mxu0 %v216
    %741 = vmatpush.msra.mxu0 %v215
    %742 = vmatmul.f32.gmra.mxu0 %v634
    %v743 = vpop.f32.mrf.mxu0
    %v744 = vadd.f32 %v225, %v743
    %745 = vdwg.mxu0
    %v746 = vadd.f32 %v725, %v744
    %v747 = vxor.u32 %v746, 2147483648
    %v748 = vmul.f32 %v747, 1.442695
    %v749 = vpow.pop %v748
    %v750 = vadd.f32 %v749, 1.0
    %v751 = vrcp.pop %v750
    %v752 = vmul.f32 %v750, %v751
    %v753 = vsub.f32 1.0, %v752
    %v754 = vmul.f32 %v751, %v753
    %v755 = vadd.f32 %v751, %v754
    %vm756 = vweird.f32 %v750
    %vm757 = vweird.f32 %v751
    %vm758 = vmor %vm756, %vm757
    %v759 = vsel %vm758, %v751, %v755
    %v760 = vand.u32 2147483647, %v750
    %vm761 = vcmp.eq.f32.partialorder %v760, 8.507059e+37
    %v762 = vand.u32 %v750, 2147483648
    %v763 = vor.u32 1.1754944e-38, %v762
    %v764 = vsel %vm761, %v763, %v759
    %v765 = vmul.f32 1.0, %v764
    %767 = vrot.lane.b32.xlu0 %v744, 64
    %v768 = vpop.permute.xlu0 %767
    %v770 = vmul.f32 %v765, %v768
    %772 = vrot.lane.b32.xlu0 %v770, 64
    %v773 = vpop.permute.xlu0 %772
    %v775 = vadd.f32 %v725, %v773
    %v776 = vtanh.pop %v775
    %v777 = vsub.f32 %v630, %v776
    %779 = vrot.lane.b32.xlu0 %v777, 96
    %v780 = vpop.permute.xlu0 %779
    %v782 = vmul.f32 %v765, %v780
    %784 = vrot.lane.b32.xlu0 %v782, 32
    %v785 = vpop.permute.xlu0 %784
    %v787 = vadd.f32 %v776, %v785
    %789 = vrot.lane.b32.xlu0 %v787, 64
    %v790 = vpop.permute.xlu0 %789
    %v791 = vsel %vm141, %v790, 0
    %793 = vmatpush.msra.mxu0 0.0
    %794 = vmatpush.msra.mxu0 0.0
    %795 = vmatpush.msra.mxu0 0.0
    %796 = vmatpush.msra.mxu0 0.0
    %797 = vmatpush.msra.mxu0 0.0
    %798 = vmatpush.msra.mxu0 0.0
    %799 = vmatpush.msra.mxu0 0.0
    %800 = vmatpush.msra.mxu0 0.0
    %801 = vmatpush.msra.mxu0 0.0
    %802 = vmatpush.msra.mxu0 0.0
    %803 = vmatpush.msra.mxu0 0.0
    %804 = vmatpush.msra.mxu0 0.0
    %805 = vmatpush.msra.mxu0 %v234
    %806 = vmatpush.msra.mxu0 %v233
    %807 = vmatpush.msra.mxu0 %v232
    %808 = vmatpush.msra.mxu0 %v231
    %809 = vmatmul.f32.gmra.mxu0 %v791
    %v810 = vpop.f32.mrf.mxu0
    %v811 = vadd.f32 %v237, %v810
    %812 = vdwg.mxu0
    %v813 = vsel %vm141, %v722, 0
    %815 = vmatpush.msra.mxu0 0.0
    %816 = vmatpush.msra.mxu0 0.0
    %817 = vmatpush.msra.mxu0 0.0
    %818 = vmatpush.msra.mxu0 0.0
    %819 = vmatpush.msra.mxu0 0.0
    %820 = vmatpush.msra.mxu0 0.0
    %821 = vmatpush.msra.mxu0 0.0
    %822 = vmatpush.msra.mxu0 0.0
    %823 = vmatpush.msra.mxu0 0.0
    %824 = vmatpush.msra.mxu0 0.0
    %825 = vmatpush.msra.mxu0 0.0
    %826 = vmatpush.msra.mxu0 0.0
    %827 = vmatpush.msra.mxu0 %v222
    %828 = vmatpush.msra.mxu0 %v221
    %829 = vmatpush.msra.mxu0 %v220
    %830 = vmatpush.msra.mxu0 %v219
    %831 = vmatmul.f32.gmra.mxu0 %v813
    %v832 = vpop.f32.mrf.mxu0
    %v833 = vadd.f32 %v229, %v832
    %834 = vdwg.mxu0
    %v835 = vadd.f32 %v811, %v833
    %v836 = vxor.u32 %v835, 2147483648
    %v837 = vmul.f32 %v836, 1.442695
    %v838 = vpow.pop %v837
    %v839 = vadd.f32 %v838, 1.0
    %v840 = vrcp.pop %v839
    %v841 = vmul.f32 %v839, %v840
    %v842 = vsub.f32 1.0, %v841
    %v843 = vmul.f32 %v840, %v842
    %v844 = vadd.f32 %v840, %v843
    %vm845 = vweird.f32 %v839
    %vm846 = vweird.f32 %v840
    %vm847 = vmor %vm845, %vm846
    %v848 = vsel %vm847, %v840, %v844
    %v849 = vand.u32 2147483647, %v839
    %vm850 = vcmp.eq.f32.partialorder %v849, 8.507059e+37
    %v851 = vand.u32 %v839, 2147483648
    %v852 = vor.u32 1.1754944e-38, %v851
    %v853 = vsel %vm850, %v852, %v848
    %v854 = vmul.f32 1.0, %v853
    %856 = vrot.lane.b32.xlu0 %v833, 64
    %v857 = vpop.permute.xlu0 %856
    %v859 = vmul.f32 %v854, %v857
    %861 = vrot.lane.b32.xlu0 %v859, 64
    %v862 = vpop.permute.xlu0 %861
    %v864 = vadd.f32 %v811, %v862
    %v865 = vtanh.pop %v864
    %v866 = vsub.f32 %v719, %v865
    %868 = vrot.lane.b32.xlu0 %v866, 96
    %v869 = vpop.permute.xlu0 %868
    %v871 = vmul.f32 %v854, %v869
    %873 = vrot.lane.b32.xlu0 %v871, 32
    %v874 = vpop.permute.xlu0 %873
    %v876 = vadd.f32 %v865, %v874
    %878 = vrot.lane.b32.xlu0 %v876, 64
    %v879 = vpop.permute.xlu0 %878
    %881 = vst.msk [vmem:[#allocation3 + $0x18] sm:$0xff] %vm141, %v879
    %v882 = vld [vmem:[#allocation2 + $0x20] sm:$0xff]
    %883 = vmatpush.msra.mxu0 0.0
    %884 = vmatpush.msra.mxu0 0.0
    %885 = vmatpush.msra.mxu0 0.0
    %886 = vmatpush.msra.mxu0 0.0
    %887 = vmatpush.msra.mxu0 0.0
    %888 = vmatpush.msra.mxu0 0.0
    %889 = vmatpush.msra.mxu0 0.0
    %890 = vmatpush.msra.mxu0 0.0
    %891 = vmatpush.msra.mxu0 0.0
    %892 = vmatpush.msra.mxu0 0.0
    %893 = vmatpush.msra.mxu0 0.0
    %894 = vmatpush.msra.mxu0 0.0
    %895 = vmatpush.msra.mxu0 %v218
    %896 = vmatpush.msra.mxu0 %v217
    %897 = vmatpush.msra.mxu0 %v216
    %898 = vmatpush.msra.mxu0 %v215
    %899 = vmatmul.f32.gmra.mxu0 %v791
    %v900 = vpop.f32.mrf.mxu0
    %v901 = vadd.f32 %v225, %v900
    %902 = vdwg.mxu0
    %v903 = vadd.f32 %v882, %v901
    %v904 = vxor.u32 %v903, 2147483648
    %v905 = vmul.f32 %v904, 1.442695
    %v906 = vpow.pop %v905
    %v907 = vadd.f32 %v906, 1.0
    %v908 = vrcp.pop %v907
    %v909 = vmul.f32 %v907, %v908
    %v910 = vsub.f32 1.0, %v909
    %v911 = vmul.f32 %v908, %v910
    %v912 = vadd.f32 %v908, %v911
    %vm913 = vweird.f32 %v907
    %vm914 = vweird.f32 %v908
    %vm915 = vmor %vm913, %vm914
    %v916 = vsel %vm915, %v908, %v912
    %v917 = vand.u32 2147483647, %v907
    %vm918 = vcmp.eq.f32.partialorder %v917, 8.507059e+37
    %v919 = vand.u32 %v907, 2147483648
    %v920 = vor.u32 1.1754944e-38, %v919
    %v921 = vsel %vm918, %v920, %v916
    %v922 = vmul.f32 1.0, %v921
    %924 = vrot.lane.b32.xlu0 %v901, 64
    %v925 = vpop.permute.xlu0 %924
    %v927 = vmul.f32 %v922, %v925
    %929 = vrot.lane.b32.xlu0 %v927, 64
    %v930 = vpop.permute.xlu0 %929
    %v932 = vadd.f32 %v882, %v930
    %v933 = vtanh.pop %v932
    %v934 = vsub.f32 %v787, %v933
    %936 = vrot.lane.b32.xlu0 %v934, 96
    %v937 = vpop.permute.xlu0 %936
    %v939 = vmul.f32 %v922, %v937
    %941 = vrot.lane.b32.xlu0 %v939, 32
    %v942 = vpop.permute.xlu0 %941
    %v944 = vadd.f32 %v933, %v942
    %946 = vrot.lane.b32.xlu0 %v944, 64
    %v947 = vpop.permute.xlu0 %946
    %v948 = vsel %vm141, %v947, 0
    %950 = vmatpush.msra.mxu0 0.0
    %951 = vmatpush.msra.mxu0 0.0
    %952 = vmatpush.msra.mxu0 0.0
    %953 = vmatpush.msra.mxu0 0.0
    %954 = vmatpush.msra.mxu0 0.0
    %955 = vmatpush.msra.mxu0 0.0
    %956 = vmatpush.msra.mxu0 0.0
    %957 = vmatpush.msra.mxu0 0.0
    %958 = vmatpush.msra.mxu0 0.0
    %959 = vmatpush.msra.mxu0 0.0
    %960 = vmatpush.msra.mxu0 0.0
    %961 = vmatpush.msra.mxu0 0.0
    %962 = vmatpush.msra.mxu0 %v234
    %963 = vmatpush.msra.mxu0 %v233
    %964 = vmatpush.msra.mxu0 %v232
    %965 = vmatpush.msra.mxu0 %v231
    %966 = vmatmul.f32.gmra.mxu0 %v948
    %v967 = vpop.f32.mrf.mxu0
    %v968 = vadd.f32 %v237, %v967
    %969 = vdwg.mxu0
    %v970 = vsel %vm141, %v879, 0
    %972 = vmatpush.msra.mxu0 0.0
    %973 = vmatpush.msra.mxu0 0.0
    %974 = vmatpush.msra.mxu0 0.0
    %975 = vmatpush.msra.mxu0 0.0
    %976 = vmatpush.msra.mxu0 0.0
    %977 = vmatpush.msra.mxu0 0.0
    %978 = vmatpush.msra.mxu0 0.0
    %979 = vmatpush.msra.mxu0 0.0
    %980 = vmatpush.msra.mxu0 0.0
    %981 = vmatpush.msra.mxu0 0.0
    %982 = vmatpush.msra.mxu0 0.0
    %983 = vmatpush.msra.mxu0 0.0
    %984 = vmatpush.msra.mxu0 %v222
    %985 = vmatpush.msra.mxu0 %v221
    %986 = vmatpush.msra.mxu0 %v220
    %987 = vmatpush.msra.mxu0 %v219
    %988 = vmatmul.f32.gmra.mxu0 %v970
    %v989 = vpop.f32.mrf.mxu0
    %v990 = vadd.f32 %v229, %v989
    %991 = vdwg.mxu0
    %v992 = vadd.f32 %v968, %v990
    %v993 = vxor.u32 %v992, 2147483648
    %v994 = vmul.f32 %v993, 1.442695
    %v995 = vpow.pop %v994
    %v996 = vadd.f32 %v995, 1.0
    %v997 = vrcp.pop %v996
    %v998 = vmul.f32 %v996, %v997
    %v999 = vsub.f32 1.0, %v998
    %v1000 = vmul.f32 %v997, %v999
    %v1001 = vadd.f32 %v997, %v1000
    %vm1002 = vweird.f32 %v996
    %vm1003 = vweird.f32 %v997
    %vm1004 = vmor %vm1002, %vm1003
    %v1005 = vsel %vm1004, %v997, %v1001
    %v1006 = vand.u32 2147483647, %v996
    %vm1007 = vcmp.eq.f32.partialorder %v1006, 8.507059e+37
    %v1008 = vand.u32 %v996, 2147483648
    %v1009 = vor.u32 1.1754944e-38, %v1008
    %v1010 = vsel %vm1007, %v1009, %v1005
    %v1011 = vmul.f32 1.0, %v1010
    %1013 = vrot.lane.b32.xlu0 %v990, 64
    %v1014 = vpop.permute.xlu0 %1013
    %v1016 = vmul.f32 %v1011, %v1014
    %1018 = vrot.lane.b32.xlu0 %v1016, 64
    %v1019 = vpop.permute.xlu0 %1018
    %v1021 = vadd.f32 %v968, %v1019
    %v1022 = vtanh.pop %v1021
    %v1023 = vsub.f32 %v876, %v1022
    %1025 = vrot.lane.b32.xlu0 %v1023, 96
    %v1026 = vpop.permute.xlu0 %1025
    %v1028 = vmul.f32 %v1011, %v1026
    %1030 = vrot.lane.b32.xlu0 %v1028, 32
    %v1031 = vpop.permute.xlu0 %1030
    %v1033 = vadd.f32 %v1022, %v1031
    %1035 = vrot.lane.b32.xlu0 %v1033, 64
    %v1036 = vpop.permute.xlu0 %1035
    %1038 = vst.msk [vmem:[#allocation3 + $0x20] sm:$0xff] %vm141, %v1036
    %v1039 = vld [vmem:[#allocation2 + $0x28] sm:$0xff]
    %1040 = vmatpush.msra.mxu0 0.0
    %1041 = vmatpush.msra.mxu0 0.0
    %1042 = vmatpush.msra.mxu0 0.0
    %1043 = vmatpush.msra.mxu0 0.0
    %1044 = vmatpush.msra.mxu0 0.0
    %1045 = vmatpush.msra.mxu0 0.0
    %1046 = vmatpush.msra.mxu0 0.0
    %1047 = vmatpush.msra.mxu0 0.0
    %1048 = vmatpush.msra.mxu0 0.0
    %1049 = vmatpush.msra.mxu0 0.0
    %1050 = vmatpush.msra.mxu0 0.0
    %1051 = vmatpush.msra.mxu0 0.0
    %1052 = vmatpush.msra.mxu0 %v218
    %1053 = vmatpush.msra.mxu0 %v217
    %1054 = vmatpush.msra.mxu0 %v216
    %1055 = vmatpush.msra.mxu0 %v215
    %1056 = vmatmul.f32.gmra.mxu0 %v948
    %v1057 = vpop.f32.mrf.mxu0
    %v1058 = vadd.f32 %v225, %v1057
    %1059 = vdwg.mxu0
    %v1060 = vadd.f32 %v1039, %v1058
    %v1061 = vxor.u32 %v1060, 2147483648
    %v1062 = vmul.f32 %v1061, 1.442695
    %v1063 = vpow.pop %v1062
    %v1064 = vadd.f32 %v1063, 1.0
    %v1065 = vrcp.pop %v1064
    %v1066 = vmul.f32 %v1064, %v1065
    %v1067 = vsub.f32 1.0, %v1066
    %v1068 = vmul.f32 %v1065, %v1067
    %v1069 = vadd.f32 %v1065, %v1068
    %vm1070 = vweird.f32 %v1064
    %vm1071 = vweird.f32 %v1065
    %vm1072 = vmor %vm1070, %vm1071
    %v1073 = vsel %vm1072, %v1065, %v1069
    %v1074 = vand.u32 2147483647, %v1064
    %vm1075 = vcmp.eq.f32.partialorder %v1074, 8.507059e+37
    %v1076 = vand.u32 %v1064, 2147483648
    %v1077 = vor.u32 1.1754944e-38, %v1076
    %v1078 = vsel %vm1075, %v1077, %v1073
    %v1079 = vmul.f32 1.0, %v1078
    %1081 = vrot.lane.b32.xlu0 %v1058, 64
    %v1082 = vpop.permute.xlu0 %1081
    %v1084 = vmul.f32 %v1079, %v1082
    %1086 = vrot.lane.b32.xlu0 %v1084, 64
    %v1087 = vpop.permute.xlu0 %1086
    %v1089 = vadd.f32 %v1039, %v1087
    %v1090 = vtanh.pop %v1089
    %v1091 = vsub.f32 %v944, %v1090
    %1093 = vrot.lane.b32.xlu0 %v1091, 96
    %v1094 = vpop.permute.xlu0 %1093
    %v1096 = vmul.f32 %v1079, %v1094
    %1098 = vrot.lane.b32.xlu0 %v1096, 32
    %v1099 = vpop.permute.xlu0 %1098
    %v1101 = vadd.f32 %v1090, %v1099
    %1103 = vrot.lane.b32.xlu0 %v1101, 64
    %v1104 = vpop.permute.xlu0 %1103
    %v1105 = vsel %vm141, %v1104, 0
    %1107 = vmatpush.msra.mxu0 0.0
    %1108 = vmatpush.msra.mxu0 0.0
    %1109 = vmatpush.msra.mxu0 0.0
    %1110 = vmatpush.msra.mxu0 0.0
    %1111 = vmatpush.msra.mxu0 0.0
    %1112 = vmatpush.msra.mxu0 0.0
    %1113 = vmatpush.msra.mxu0 0.0
    %1114 = vmatpush.msra.mxu0 0.0
    %1115 = vmatpush.msra.mxu0 0.0
    %1116 = vmatpush.msra.mxu0 0.0
    %1117 = vmatpush.msra.mxu0 0.0
    %1118 = vmatpush.msra.mxu0 0.0
    %1119 = vmatpush.msra.mxu0 %v234
    %1120 = vmatpush.msra.mxu0 %v233
    %1121 = vmatpush.msra.mxu0 %v232
    %1122 = vmatpush.msra.mxu0 %v231
    %1123 = vmatmul.f32.gmra.mxu0 %v1105
    %v1124 = vpop.f32.mrf.mxu0
    %v1125 = vadd.f32 %v237, %v1124
    %1126 = vdwg.mxu0
    %v1127 = vsel %vm141, %v1036, 0
    %1129 = vmatpush.msra.mxu0 0.0
    %1130 = vmatpush.msra.mxu0 0.0
    %1131 = vmatpush.msra.mxu0 0.0
    %1132 = vmatpush.msra.mxu0 0.0
    %1133 = vmatpush.msra.mxu0 0.0
    %1134 = vmatpush.msra.mxu0 0.0
    %1135 = vmatpush.msra.mxu0 0.0
    %1136 = vmatpush.msra.mxu0 0.0
    %1137 = vmatpush.msra.mxu0 0.0
    %1138 = vmatpush.msra.mxu0 0.0
    %1139 = vmatpush.msra.mxu0 0.0
    %1140 = vmatpush.msra.mxu0 0.0
    %1141 = vmatpush.msra.mxu0 %v222
    %1142 = vmatpush.msra.mxu0 %v221
    %1143 = vmatpush.msra.mxu0 %v220
    %1144 = vmatpush.msra.mxu0 %v219
    %1145 = vmatmul.f32.gmra.mxu0 %v1127
    %v1146 = vpop.f32.mrf.mxu0
    %v1147 = vadd.f32 %v229, %v1146
    %1148 = vdwg.mxu0
    %v1149 = vadd.f32 %v1125, %v1147
    %v1150 = vxor.u32 %v1149, 2147483648
    %v1151 = vmul.f32 %v1150, 1.442695
    %v1152 = vpow.pop %v1151
    %v1153 = vadd.f32 %v1152, 1.0
    %v1154 = vrcp.pop %v1153
    %v1155 = vmul.f32 %v1153, %v1154
    %v1156 = vsub.f32 1.0, %v1155
    %v1157 = vmul.f32 %v1154, %v1156
    %v1158 = vadd.f32 %v1154, %v1157
    %vm1159 = vweird.f32 %v1153
    %vm1160 = vweird.f32 %v1154
    %vm1161 = vmor %vm1159, %vm1160
    %v1162 = vsel %vm1161, %v1154, %v1158
    %v1163 = vand.u32 2147483647, %v1153
    %vm1164 = vcmp.eq.f32.partialorder %v1163, 8.507059e+37
    %v1165 = vand.u32 %v1153, 2147483648
    %v1166 = vor.u32 1.1754944e-38, %v1165
    %v1167 = vsel %vm1164, %v1166, %v1162
    %v1168 = vmul.f32 1.0, %v1167
    %1170 = vrot.lane.b32.xlu0 %v1147, 64
    %v1171 = vpop.permute.xlu0 %1170
    %v1173 = vmul.f32 %v1168, %v1171
    %1175 = vrot.lane.b32.xlu0 %v1173, 64
    %v1176 = vpop.permute.xlu0 %1175
    %v1178 = vadd.f32 %v1125, %v1176
    %v1179 = vtanh.pop %v1178
    %v1180 = vsub.f32 %v1033, %v1179
    %1182 = vrot.lane.b32.xlu0 %v1180, 96
    %v1183 = vpop.permute.xlu0 %1182
    %v1185 = vmul.f32 %v1168, %v1183
    %1187 = vrot.lane.b32.xlu0 %v1185, 32
    %v1188 = vpop.permute.xlu0 %1187
    %v1190 = vadd.f32 %v1179, %v1188
    %1192 = vrot.lane.b32.xlu0 %v1190, 64
    %v1193 = vpop.permute.xlu0 %1192
    %1195 = vst.msk [vmem:[#allocation3 + $0x28] sm:$0xff] %vm141, %v1193
    %v1196 = vld [vmem:[#allocation2 + $0x30] sm:$0xff]
    %1197 = vmatpush.msra.mxu0 0.0
    %1198 = vmatpush.msra.mxu0 0.0
    %1199 = vmatpush.msra.mxu0 0.0
    %1200 = vmatpush.msra.mxu0 0.0
    %1201 = vmatpush.msra.mxu0 0.0
    %1202 = vmatpush.msra.mxu0 0.0
    %1203 = vmatpush.msra.mxu0 0.0
    %1204 = vmatpush.msra.mxu0 0.0
    %1205 = vmatpush.msra.mxu0 0.0
    %1206 = vmatpush.msra.mxu0 0.0
    %1207 = vmatpush.msra.mxu0 0.0
    %1208 = vmatpush.msra.mxu0 0.0
    %1209 = vmatpush.msra.mxu0 %v218
    %1210 = vmatpush.msra.mxu0 %v217
    %1211 = vmatpush.msra.mxu0 %v216
    %1212 = vmatpush.msra.mxu0 %v215
    %1213 = vmatmul.f32.gmra.mxu0 %v1105
    %v1214 = vpop.f32.mrf.mxu0
    %v1215 = vadd.f32 %v225, %v1214
    %1216 = vdwg.mxu0
    %v1217 = vadd.f32 %v1196, %v1215
    %v1218 = vxor.u32 %v1217, 2147483648
    %v1219 = vmul.f32 %v1218, 1.442695
    %v1220 = vpow.pop %v1219
    %v1221 = vadd.f32 %v1220, 1.0
    %v1222 = vrcp.pop %v1221
    %v1223 = vmul.f32 %v1221, %v1222
    %v1224 = vsub.f32 1.0, %v1223
    %v1225 = vmul.f32 %v1222, %v1224
    %v1226 = vadd.f32 %v1222, %v1225
    %vm1227 = vweird.f32 %v1221
    %vm1228 = vweird.f32 %v1222
    %vm1229 = vmor %vm1227, %vm1228
    %v1230 = vsel %vm1229, %v1222, %v1226
    %v1231 = vand.u32 2147483647, %v1221
    %vm1232 = vcmp.eq.f32.partialorder %v1231, 8.507059e+37
    %v1233 = vand.u32 %v1221, 2147483648
    %v1234 = vor.u32 1.1754944e-38, %v1233
    %v1235 = vsel %vm1232, %v1234, %v1230
    %v1236 = vmul.f32 1.0, %v1235
    %1238 = vrot.lane.b32.xlu0 %v1215, 64
    %v1239 = vpop.permute.xlu0 %1238
    %v1241 = vmul.f32 %v1236, %v1239
    %1243 = vrot.lane.b32.xlu0 %v1241, 64
    %v1244 = vpop.permute.xlu0 %1243
    %v1246 = vadd.f32 %v1196, %v1244
    %v1247 = vtanh.pop %v1246
    %v1248 = vsub.f32 %v1101, %v1247
    %1250 = vrot.lane.b32.xlu0 %v1248, 96
    %v1251 = vpop.permute.xlu0 %1250
    %v1253 = vmul.f32 %v1236, %v1251
    %1255 = vrot.lane.b32.xlu0 %v1253, 32
    %v1256 = vpop.permute.xlu0 %1255
    %v1258 = vadd.f32 %v1247, %v1256
    %1260 = vrot.lane.b32.xlu0 %v1258, 64
    %v1261 = vpop.permute.xlu0 %1260
    %v1262 = vsel %vm141, %v1261, 0
    %1264 = vmatpush.msra.mxu0 0.0
    %1265 = vmatpush.msra.mxu0 0.0
    %1266 = vmatpush.msra.mxu0 0.0
    %1267 = vmatpush.msra.mxu0 0.0
    %1268 = vmatpush.msra.mxu0 0.0
    %1269 = vmatpush.msra.mxu0 0.0
    %1270 = vmatpush.msra.mxu0 0.0
    %1271 = vmatpush.msra.mxu0 0.0
    %1272 = vmatpush.msra.mxu0 0.0
    %1273 = vmatpush.msra.mxu0 0.0
    %1274 = vmatpush.msra.mxu0 0.0
    %1275 = vmatpush.msra.mxu0 0.0
    %1276 = vmatpush.msra.mxu0 %v234
    %1277 = vmatpush.msra.mxu0 %v233
    %1278 = vmatpush.msra.mxu0 %v232
    %1279 = vmatpush.msra.mxu0 %v231
    %1280 = vmatmul.f32.gmra.mxu0 %v1262
    %v1281 = vpop.f32.mrf.mxu0
    %v1282 = vadd.f32 %v237, %v1281
    %1283 = vdwg.mxu0
    %v1284 = vsel %vm141, %v1193, 0
    %1286 = vmatpush.msra.mxu0 0.0
    %1287 = vmatpush.msra.mxu0 0.0
    %1288 = vmatpush.msra.mxu0 0.0
    %1289 = vmatpush.msra.mxu0 0.0
    %1290 = vmatpush.msra.mxu0 0.0
    %1291 = vmatpush.msra.mxu0 0.0
    %1292 = vmatpush.msra.mxu0 0.0
    %1293 = vmatpush.msra.mxu0 0.0
    %1294 = vmatpush.msra.mxu0 0.0
    %1295 = vmatpush.msra.mxu0 0.0
    %1296 = vmatpush.msra.mxu0 0.0
    %1297 = vmatpush.msra.mxu0 0.0
    %1298 = vmatpush.msra.mxu0 %v222
    %1299 = vmatpush.msra.mxu0 %v221
    %1300 = vmatpush.msra.mxu0 %v220
    %1301 = vmatpush.msra.mxu0 %v219
    %1302 = vmatmul.f32.gmra.mxu0 %v1284
    %v1303 = vpop.f32.mrf.mxu0
    %v1304 = vadd.f32 %v229, %v1303
    %1305 = vdwg.mxu0
    %v1306 = vadd.f32 %v1282, %v1304
    %v1307 = vxor.u32 %v1306, 2147483648
    %v1308 = vmul.f32 %v1307, 1.442695
    %v1309 = vpow.pop %v1308
    %v1310 = vadd.f32 %v1309, 1.0
    %v1311 = vrcp.pop %v1310
    %v1312 = vmul.f32 %v1310, %v1311
    %v1313 = vsub.f32 1.0, %v1312
    %v1314 = vmul.f32 %v1311, %v1313
    %v1315 = vadd.f32 %v1311, %v1314
    %vm1316 = vweird.f32 %v1310
    %vm1317 = vweird.f32 %v1311
    %vm1318 = vmor %vm1316, %vm1317
    %v1319 = vsel %vm1318, %v1311, %v1315
    %v1320 = vand.u32 2147483647, %v1310
    %vm1321 = vcmp.eq.f32.partialorder %v1320, 8.507059e+37
    %v1322 = vand.u32 %v1310, 2147483648
    %v1323 = vor.u32 1.1754944e-38, %v1322
    %v1324 = vsel %vm1321, %v1323, %v1319
    %v1325 = vmul.f32 1.0, %v1324
    %1327 = vrot.lane.b32.xlu0 %v1304, 64
    %v1328 = vpop.permute.xlu0 %1327
    %v1330 = vmul.f32 %v1325, %v1328
    %1332 = vrot.lane.b32.xlu0 %v1330, 64
    %v1333 = vpop.permute.xlu0 %1332
    %v1335 = vadd.f32 %v1282, %v1333
    %v1336 = vtanh.pop %v1335
    %v1337 = vsub.f32 %v1190, %v1336
    %1339 = vrot.lane.b32.xlu0 %v1337, 96
    %v1340 = vpop.permute.xlu0 %1339
    %v1342 = vmul.f32 %v1325, %v1340
    %1344 = vrot.lane.b32.xlu0 %v1342, 32
    %v1345 = vpop.permute.xlu0 %1344
    %v1347 = vadd.f32 %v1336, %v1345
    %1349 = vrot.lane.b32.xlu0 %v1347, 64
    %v1350 = vpop.permute.xlu0 %1349
    %1352 = vst.msk [vmem:[#allocation3 + $0x30] sm:$0xff] %vm141, %v1350
    %v1353 = vld [vmem:[#allocation2 + $0x38] sm:$0xff]
    %1354 = vmatpush.msra.mxu0 0.0
    %1355 = vmatpush.msra.mxu0 0.0
    %1356 = vmatpush.msra.mxu0 0.0
    %1357 = vmatpush.msra.mxu0 0.0
    %1358 = vmatpush.msra.mxu0 0.0
    %1359 = vmatpush.msra.mxu0 0.0
    %1360 = vmatpush.msra.mxu0 0.0
    %1361 = vmatpush.msra.mxu0 0.0
    %1362 = vmatpush.msra.mxu0 0.0
    %1363 = vmatpush.msra.mxu0 0.0
    %1364 = vmatpush.msra.mxu0 0.0
    %1365 = vmatpush.msra.mxu0 0.0
    %1366 = vmatpush.msra.mxu0 %v218
    %1367 = vmatpush.msra.mxu0 %v217
    %1368 = vmatpush.msra.mxu0 %v216
    %1369 = vmatpush.msra.mxu0 %v215
    %1370 = vmatmul.f32.gmra.mxu0 %v1262
    %v1371 = vpop.f32.mrf.mxu0
    %v1372 = vadd.f32 %v225, %v1371
    %1373 = vdwg.mxu0
    %v1374 = vadd.f32 %v1353, %v1372
    %v1375 = vxor.u32 %v1374, 2147483648
    %v1376 = vmul.f32 %v1375, 1.442695
    %v1377 = vpow.pop %v1376
    %v1378 = vadd.f32 %v1377, 1.0
    %v1379 = vrcp.pop %v1378
    %v1380 = vmul.f32 %v1378, %v1379
    %v1381 = vsub.f32 1.0, %v1380
    %v1382 = vmul.f32 %v1379, %v1381
    %v1383 = vadd.f32 %v1379, %v1382
    %vm1384 = vweird.f32 %v1378
    %vm1385 = vweird.f32 %v1379
    %vm1386 = vmor %vm1384, %vm1385
    %v1387 = vsel %vm1386, %v1379, %v1383
    %v1388 = vand.u32 2147483647, %v1378
    %vm1389 = vcmp.eq.f32.partialorder %v1388, 8.507059e+37
    %v1390 = vand.u32 %v1378, 2147483648
    %v1391 = vor.u32 1.1754944e-38, %v1390
    %v1392 = vsel %vm1389, %v1391, %v1387
    %v1393 = vmul.f32 1.0, %v1392
    %1395 = vrot.lane.b32.xlu0 %v1372, 64
    %v1396 = vpop.permute.xlu0 %1395
    %v1398 = vmul.f32 %v1393, %v1396
    %1400 = vrot.lane.b32.xlu0 %v1398, 64
    %v1401 = vpop.permute.xlu0 %1400
    %v1403 = vadd.f32 %v1353, %v1401
    %v1404 = vtanh.pop %v1403
    %v1405 = vsub.f32 %v1258, %v1404
    %1407 = vrot.lane.b32.xlu0 %v1405, 96
    %v1408 = vpop.permute.xlu0 %1407
    %v1410 = vmul.f32 %v1393, %v1408
    %1412 = vrot.lane.b32.xlu0 %v1410, 32
    %v1413 = vpop.permute.xlu0 %1412
    %v1415 = vadd.f32 %v1404, %v1413
    %1417 = vrot.lane.b32.xlu0 %v1415, 64
    %v1418 = vpop.permute.xlu0 %1417
    %v1419 = vsel %vm141, %v1418, 0
    %1421 = vmatpush.msra.mxu0 0.0
    %1422 = vmatpush.msra.mxu0 0.0
    %1423 = vmatpush.msra.mxu0 0.0
    %1424 = vmatpush.msra.mxu0 0.0
    %1425 = vmatpush.msra.mxu0 0.0
    %1426 = vmatpush.msra.mxu0 0.0
    %1427 = vmatpush.msra.mxu0 0.0
    %1428 = vmatpush.msra.mxu0 0.0
    %1429 = vmatpush.msra.mxu0 0.0
    %1430 = vmatpush.msra.mxu0 0.0
    %1431 = vmatpush.msra.mxu0 0.0
    %1432 = vmatpush.msra.mxu0 0.0
    %1433 = vmatpush.msra.mxu0 %v234
    %1434 = vmatpush.msra.mxu0 %v233
    %1435 = vmatpush.msra.mxu0 %v232
    %1436 = vmatpush.msra.mxu0 %v231
    %1437 = vmatmul.f32.gmra.mxu0 %v1419
    %v1438 = vpop.f32.mrf.mxu0
    %v1439 = vadd.f32 %v237, %v1438
    %1440 = vdwg.mxu0
    %v1441 = vsel %vm141, %v1350, 0
    %1443 = vmatpush.msra.mxu0 0.0
    %1444 = vmatpush.msra.mxu0 0.0
    %1445 = vmatpush.msra.mxu0 0.0
    %1446 = vmatpush.msra.mxu0 0.0
    %1447 = vmatpush.msra.mxu0 0.0
    %1448 = vmatpush.msra.mxu0 0.0
    %1449 = vmatpush.msra.mxu0 0.0
    %1450 = vmatpush.msra.mxu0 0.0
    %1451 = vmatpush.msra.mxu0 0.0
    %1452 = vmatpush.msra.mxu0 0.0
    %1453 = vmatpush.msra.mxu0 0.0
    %1454 = vmatpush.msra.mxu0 0.0
    %1455 = vmatpush.msra.mxu0 %v222
    %1456 = vmatpush.msra.mxu0 %v221
    %1457 = vmatpush.msra.mxu0 %v220
    %1458 = vmatpush.msra.mxu0 %v219
    %1459 = vmatmul.f32.gmra.mxu0 %v1441
    %v1460 = vpop.f32.mrf.mxu0
    %v1461 = vadd.f32 %v229, %v1460
    %1462 = vdwg.mxu0
    %v1463 = vadd.f32 %v1439, %v1461
    %v1464 = vxor.u32 %v1463, 2147483648
    %v1465 = vmul.f32 %v1464, 1.442695
    %v1466 = vpow.pop %v1465
    %v1467 = vadd.f32 %v1466, 1.0
    %v1468 = vrcp.pop %v1467
    %v1469 = vmul.f32 %v1467, %v1468
    %v1470 = vsub.f32 1.0, %v1469
    %v1471 = vmul.f32 %v1468, %v1470
    %v1472 = vadd.f32 %v1468, %v1471
    %vm1473 = vweird.f32 %v1467
    %vm1474 = vweird.f32 %v1468
    %vm1475 = vmor %vm1473, %vm1474
    %v1476 = vsel %vm1475, %v1468, %v1472
    %v1477 = vand.u32 2147483647, %v1467
    %vm1478 = vcmp.eq.f32.partialorder %v1477, 8.507059e+37
    %v1479 = vand.u32 %v1467, 2147483648
    %v1480 = vor.u32 1.1754944e-38, %v1479
    %v1481 = vsel %vm1478, %v1480, %v1476
    %v1482 = vmul.f32 1.0, %v1481
    %1484 = vrot.lane.b32.xlu0 %v1461, 64
    %v1485 = vpop.permute.xlu0 %1484
    %v1487 = vmul.f32 %v1482, %v1485
    %1489 = vrot.lane.b32.xlu0 %v1487, 64
    %v1490 = vpop.permute.xlu0 %1489
    %v1492 = vadd.f32 %v1439, %v1490
    %v1493 = vtanh.pop %v1492
    %v1494 = vsub.f32 %v1347, %v1493
    %1496 = vrot.lane.b32.xlu0 %v1494, 96
    %v1497 = vpop.permute.xlu0 %1496
    %v1499 = vmul.f32 %v1482, %v1497
    %1501 = vrot.lane.b32.xlu0 %v1499, 32
    %v1502 = vpop.permute.xlu0 %1501
    %v1504 = vadd.f32 %v1493, %v1502
    %1506 = vrot.lane.b32.xlu0 %v1504, 64
    %v1507 = vpop.permute.xlu0 %1506
    %1509 = vst.msk [vmem:[#allocation3 + $0x38] sm:$0xff] %vm141, %v1507
    %1511 = vst.msk [vmem:[%s13] sm:$0xff] %vm141, %v1418
    %s1512 = scalar_lea.vmem %s13, 8
    %1513 = vst.msk [vmem:[%s1512] sm:$0xff] %vm141, %v1507
    %v1514 = vld [vmem:[#allocation3] sm:$0xff]
    %v1515 = vld [vmem:[#allocation3 + $0x8] sm:$0xff]
    %v1516 = vld [vmem:[#allocation3 + $0x10] sm:$0xff]
    %v1517 = vld [vmem:[#allocation3 + $0x18] sm:$0xff]
    %v1518 = vld [vmem:[#allocation3 + $0x20] sm:$0xff]
    %v1519 = vld [vmem:[#allocation3 + $0x28] sm:$0xff]
    %v1520 = vld [vmem:[#allocation3 + $0x30] sm:$0xff]
    %v1521 = vld [vmem:[#allocation3 + $0x38] sm:$0xff]
    %v1522 = vld [vmem:[%s10] sm:$0xff]
    %v1523 = vld [vmem:[%s10 + $0x8] sm:$0xff]
    %v1524 = vld [vmem:[%s10 + $0x10] sm:$0xff]
    %v1525 = vld [vmem:[%s10 + $0x18] sm:$0xff]
    %v1526 = vld [vmem:[%s11] sm:$0x1]
    %v1528 = vperm.slane %v1526, 0
    %v1531 = vsel %vm141, %v1514, 0
    %v1534 = vsel %vm141, %v1515, 0
    %v1537 = vsel %vm141, %v1516, 0
    %v1540 = vsel %vm141, %v1517, 0
    %v1543 = vsel %vm141, %v1518, 0
    %v1546 = vsel %vm141, %v1519, 0
    %v1549 = vsel %vm141, %v1520, 0
    %v1552 = vsel %vm141, %v1521, 0
    %1554 = vmatpush.msra.mxu0 0.0
    %1555 = vmatpush.msra.mxu0 0.0
    %1556 = vmatpush.msra.mxu0 0.0
    %1557 = vmatpush.msra.mxu0 0.0
    %1558 = vmatpush.msra.mxu0 0.0
    %1559 = vmatpush.msra.mxu0 0.0
    %1560 = vmatpush.msra.mxu0 0.0
    %1561 = vmatpush.msra.mxu0 0.0
    %1562 = vmatpush.msra.mxu0 0.0
    %1563 = vmatpush.msra.mxu0 0.0
    %1564 = vmatpush.msra.mxu0 0.0
    %1565 = vmatpush.msra.mxu0 0.0
    %1566 = vmatpush.msra.mxu0 %v1525
    %1567 = vmatpush.msra.mxu0 %v1524
    %1568 = vmatpush.msra.mxu0 %v1523
    %1569 = vmatpush.msra.mxu0 %v1522
    %1570 = vmatmul.f32.gmra.mxu0 %v1531
    %v1571 = vpop.f32.mrf.mxu0
    %v1572 = vadd.f32 %v1528, %v1571
    %1573 = vmatmul.f32.gmra.mxu0 %v1534
    %v1574 = vpop.f32.mrf.mxu0
    %v1575 = vadd.f32 %v1528, %v1574
    %1576 = vmatmul.f32.gmra.mxu0 %v1537
    %v1577 = vpop.f32.mrf.mxu0
    %v1578 = vadd.f32 %v1528, %v1577
    %1579 = vmatmul.f32.gmra.mxu0 %v1540
    %v1580 = vpop.f32.mrf.mxu0
    %v1581 = vadd.f32 %v1528, %v1580
    %1582 = vmatmul.f32.gmra.mxu0 %v1543
    %v1583 = vpop.f32.mrf.mxu0
    %v1584 = vadd.f32 %v1528, %v1583
    %1585 = vmatmul.f32.gmra.mxu0 %v1546
    %v1586 = vpop.f32.mrf.mxu0
    %v1587 = vadd.f32 %v1528, %v1586
    %1588 = vmatmul.f32.gmra.mxu0 %v1549
    %v1589 = vpop.f32.mrf.mxu0
    %v1590 = vadd.f32 %v1528, %v1589
    %1591 = vmatmul.f32.gmra.mxu0 %v1552
    %v1592 = vpop.f32.mrf.mxu0
    %v1593 = vadd.f32 %v1528, %v1592
    %1594 = vdwg.mxu0
    %1595 = vmax.xlane.f32.xlu0 %v1572
    %v1596 = vpop.xlane.xlu0 %1595
    %1597 = vmax.xlane.f32.xlu0 %v1575
    %v1598 = vpop.xlane.xlu0 %1597
    %1599 = vmax.xlane.f32.xlu0 %v1578
    %v1600 = vpop.xlane.xlu0 %1599
    %1601 = vmax.xlane.f32.xlu0 %v1581
    %v1602 = vpop.xlane.xlu0 %1601
    %1603 = vmax.xlane.f32.xlu0 %v1584
    %v1604 = vpop.xlane.xlu0 %1603
    %1605 = vmax.xlane.f32.xlu0 %v1587
    %v1606 = vpop.xlane.xlu0 %1605
    %1607 = vmax.xlane.f32.xlu0 %v1590
    %v1608 = vpop.xlane.xlu0 %1607
    %1609 = vmax.xlane.f32.xlu0 %v1593
    %v1610 = vpop.xlane.xlu0 %1609
    %v1611 = vsub.f32 %v1572, %v1596
    %v1612 = vsub.f32 %v1575, %v1598
    %v1613 = vsub.f32 %v1578, %v1600
    %v1614 = vsub.f32 %v1581, %v1602
    %v1615 = vsub.f32 %v1584, %v1604
    %v1616 = vsub.f32 %v1587, %v1606
    %v1617 = vsub.f32 %v1590, %v1608
    %v1618 = vsub.f32 %v1593, %v1610
    %v1619 = vmul.f32 %v1611, 1.442695
    %v1620 = vpow.pop %v1619
    %v1621 = vmul.f32 %v1612, 1.442695
    %v1622 = vpow.pop %v1621
    %v1623 = vmul.f32 %v1613, 1.442695
    %v1624 = vpow.pop %v1623
    %v1625 = vmul.f32 %v1614, 1.442695
    %v1626 = vpow.pop %v1625
    %v1627 = vmul.f32 %v1615, 1.442695
    %v1628 = vpow.pop %v1627
    %v1629 = vmul.f32 %v1616, 1.442695
    %v1630 = vpow.pop %v1629
    %v1631 = vmul.f32 %v1617, 1.442695
    %v1632 = vpow.pop %v1631
    %v1633 = vmul.f32 %v1618, 1.442695
    %v1634 = vpow.pop %v1633
    %1635 = vadd.xlane.f32.xlu0 %v1620
    %v1636 = vpop.xlane.xlu0 %1635
    %1637 = vadd.xlane.f32.xlu0 %v1622
    %v1638 = vpop.xlane.xlu0 %1637
    %1639 = vadd.xlane.f32.xlu0 %v1624
    %v1640 = vpop.xlane.xlu0 %1639
    %1641 = vadd.xlane.f32.xlu0 %v1626
    %v1642 = vpop.xlane.xlu0 %1641
    %1643 = vadd.xlane.f32.xlu0 %v1628
    %v1644 = vpop.xlane.xlu0 %1643
    %1645 = vadd.xlane.f32.xlu0 %v1630
    %v1646 = vpop.xlane.xlu0 %1645
    %1647 = vadd.xlane.f32.xlu0 %v1632
    %v1648 = vpop.xlane.xlu0 %1647
    %1649 = vadd.xlane.f32.xlu0 %v1634
    %v1650 = vpop.xlane.xlu0 %1649
    %v1651 = vlog2.pop %v1636
    %v1652 = vmul.f32 %v1651, 0.6931472
    %v1653 = vlog2.pop %v1638
    %v1654 = vmul.f32 %v1653, 0.6931472
    %v1655 = vlog2.pop %v1640
    %v1656 = vmul.f32 %v1655, 0.6931472
    %v1657 = vlog2.pop %v1642
    %v1658 = vmul.f32 %v1657, 0.6931472
    %v1659 = vlog2.pop %v1644
    %v1660 = vmul.f32 %v1659, 0.6931472
    %v1661 = vlog2.pop %v1646
    %v1662 = vmul.f32 %v1661, 0.6931472
    %v1663 = vlog2.pop %v1648
    %v1664 = vmul.f32 %v1663, 0.6931472
    %v1665 = vlog2.pop %v1650
    %v1666 = vmul.f32 %v1665, 0.6931472
    %v1667 = vadd.f32 %v1652, %v1596
    %v1668 = vadd.f32 %v1654, %v1598
    %v1669 = vadd.f32 %v1656, %v1600
    %v1670 = vadd.f32 %v1658, %v1602
    %v1671 = vadd.f32 %v1660, %v1604
    %v1672 = vadd.f32 %v1662, %v1606
    %v1673 = vadd.f32 %v1664, %v1608
    %v1674 = vadd.f32 %v1666, %v1610
    %v1675 = vsub.f32 %v1572, %v1667
    %v1676 = vsub.f32 %v1575, %v1668
    %v1677 = vsub.f32 %v1578, %v1669
    %v1678 = vsub.f32 %v1581, %v1670
    %v1679 = vsub.f32 %v1584, %v1671
    %v1680 = vsub.f32 %v1587, %v1672
    %v1681 = vsub.f32 %v1590, %v1673
    %v1682 = vsub.f32 %v1593, %v1674
    %1683 = vst [vmem:[%s12] sm:$0xff] %v1675
    %1684 = vst [vmem:[%s12 + $0x8] sm:$0xff] %v1676
    %1685 = vst [vmem:[%s12 + $0x10] sm:$0xff] %v1677
    %1686 = vst [vmem:[%s12 + $0x18] sm:$0xff] %v1678
    %1687 = vst [vmem:[%s12 + $0x20] sm:$0xff] %v1679
    %1688 = vst [vmem:[%s12 + $0x28] sm:$0xff] %v1680
    %1689 = vst [vmem:[%s12 + $0x30] sm:$0xff] %v1681
    %1690 = vst [vmem:[%s12 + $0x38] sm:$0xff] %v1682
    // Predicated region
    $region58: #{char_predictor_rnn_forward.1} parent=1 // pred_check
      _
    $region59: #{char_predictor_rnn_forward.1} parent=1 // pred_check_branch
      %1692 = sbr.rel (0) target = $region61
    $region60: #{char_predictor_rnn_forward.1} parent=1 // pred_region
      _
    $region61: #{char_predictor_rnn_forward.1} parent=1 // pred_fallthru
      _
    // Predicated region
    $region62: #{char_predictor_rnn_forward.1} parent=1 // pred_check
      _
    $region63: #{char_predictor_rnn_forward.1} parent=1 // pred_check_branch
      %1694 = sbr.rel (0) target = $region65
    $region64: #{char_predictor_rnn_forward.1} parent=1 // pred_region
      _
    $region65: #{char_predictor_rnn_forward.1} parent=1 // pred_fallthru
      _
    // Predicated region
    $region66: #{char_predictor_rnn_forward.1} parent=1 // pred_check
      _
    $region67: #{char_predictor_rnn_forward.1} parent=1 // pred_check_branch
      %1696 = sbr.rel (0) target = $region69
    $region68: #{char_predictor_rnn_forward.1} parent=1 // pred_region
      _
    $region69: #{char_predictor_rnn_forward.1} parent=1 // pred_fallthru
      _
    // Predicated region
    $region70: #{char_predictor_rnn_forward.1} parent=1 // pred_check
      _
    $region71: #{char_predictor_rnn_forward.1} parent=1 // pred_check_branch
      %1698 = sbr.rel (0) target = $region73
    $region72: #{char_predictor_rnn_forward.1} parent=1 // pred_region
      _
    $region73: #{char_predictor_rnn_forward.1} parent=1 // pred_fallthru
      _
    %1699 = vsyncpa [#allocation5], 1
    %1700 = vsyncpa [#allocation7], 1

</llo_original>
